<compile_context>
chip_gen: v7x
topology: tpu7x:2x2x1
jax: 0.10.0
libtpu: 0.0.40
codegen_flags: <defaults>
</compile_context>

<pallas_src>
import functools

import jax
import jax.numpy as jnp
from jax.experimental import pallas as pl
from jax.experimental.pallas import tpu as pltpu
import numpy as np


def lstm_tagger_kernel(sent_ref, gx_tab_ref, w_hh_ref, w_out_ref, b_out_ref,
                       out_ref, *, block_batch, seq_len):
    """One batch-block of the LSTM tagger, entirely in VMEM/SMEM.

    sent_ref:   (Bp*T,) int32  SMEM  flattened token ids (scalar prefetch)
    gx_tab_ref: (V, 4H)  f32   VMEM  embedding @ W_ih^T + (b_ih+b_hh)
    w_hh_ref:   (H, 4H)  f32   VMEM  hidden->gates weights (PyTorch [i,f,g,o])
    w_out_ref:  (H, Kp)  f32   VMEM  output weights, zero-padded to Kp lanes
    b_out_ref:  (1, Kp)  f32   VMEM  output bias, padded lanes = -1e30
    out_ref:    (BB*T, Kp)     VMEM  log-softmax scores, rows t-major in block
    """
    BB, T = block_batch, seq_len
    H = w_hh_ref.shape[0]

    blk = pl.program_id(0)
    base = blk * (BB * T)                 # flat index of this block's 1st token

    w_hh = w_hh_ref[...]                  # load once, reused every step

    h = jnp.zeros((BB, H), jnp.float32)
    c = jnp.zeros((BB, H), jnp.float32)
    hs = []

    for t in range(T):                    # tiny, fully unrolled recurrence
        # In-kernel fused embedding + input-projection gather: one row of
        # gx_table per (sentence, t) token, assembled into a (BB, 4H) tile.
        rows = []
        for b in range(BB):
            tok = sent_ref[base + b * T + t]              # SMEM scalar read
            rows.append(gx_tab_ref[pl.ds(tok, 1), :])     # (1, 4H) row gather
        gx = jnp.concatenate(rows, axis=0)                # (BB, 4H)

        gates = gx + jnp.dot(h, w_hh, preferred_element_type=jnp.float32)

        # PyTorch gate order [i, f, g, o]; activations only on the needed
        # slices (sigmoid on 3H lanes, tanh on H lanes).
        i_g = jax.nn.sigmoid(gates[:, 0 * H:1 * H])
        f_g = jax.nn.sigmoid(gates[:, 1 * H:2 * H])
        g_g = jnp.tanh(gates[:, 2 * H:3 * H])
        o_g = jax.nn.sigmoid(gates[:, 3 * H:4 * H])

        c = f_g * c + i_g * g_g
        h = o_g * jnp.tanh(c)
        hs.append(h)

    # Hoisted output head: one matmul + batched log_softmax + one lane-dense
    # store.  Rows are t-major within the block: row = t*BB + b.
    h_hist = jnp.concatenate(hs, axis=0)                  # (T*BB, H)
    logits = jnp.dot(h_hist, w_out_ref[...],
                     preferred_element_type=jnp.float32) + b_out_ref[...]
    m = jnp.max(logits, axis=-1, keepdims=True)
    lse = m + jnp.log(jnp.sum(jnp.exp(logits - m), axis=-1, keepdims=True))
    out_ref[...] = logits - lse


def prepare_params(params, *, lane=128):
    """One-time parameter re-layout (hoisted out of the per-call path)."""
    emb = params["embedding"].astype(jnp.float32)          # (V, E)
    w_ih = params["w_ih"].astype(jnp.float32)              # (4H, E)
    w_hh = params["w_hh"].astype(jnp.float32)              # (4H, H)
    bias = (params["b_ih"] + params["b_hh"]).astype(jnp.float32)   # (4H,)
    w_out = params["w_out"].astype(jnp.float32)            # (K, H)
    b_out = params["b_out"].astype(jnp.float32)            # (K,)

    H = w_hh.shape[1]
    K = w_out.shape[0]
    Kp = ((K + lane - 1) // lane) * lane

    # Fused embedding-lookup + input projection: row v = E(v) @ W_ih^T + b.
    gx_table = emb @ w_ih.T + bias[None, :]                # (V, 4H)
    w_hh_t = w_hh.T                                        # (H, 4H)
    # Output head padded to a lane-dense Kp; padded tag lanes get a -1e30 bias
    # so the in-kernel max-shifted log_softmax ignores them exactly.
    w_out_p = jnp.pad(w_out.T, ((0, 0), (0, Kp - K)))      # (H, Kp)
    b_out_p = jnp.pad(b_out, (0, Kp - K),
                      constant_values=-1e30).reshape(1, Kp)

    return {"gx_table": gx_table, "w_hh_t": w_hh_t,
            "w_out_p": w_out_p, "b_out_p": b_out_p,
            "hidden_dim": H, "tagset_size": K}


def lstm_tagger_forward_batched(sentences, prepped, *, block_batch=8):
    """Tag a batch of sentences.  sentences: (B, T) int32 -> (B, T, K) f32."""
    B, T = sentences.shape
    BB = block_batch
    gx_table = prepped["gx_table"]
    w_hh_t = prepped["w_hh_t"]
    w_out_p = prepped["w_out_p"]
    b_out_p = prepped["b_out_p"]
    K = prepped["tagset_size"]
    V, G = gx_table.shape
    H = w_hh_t.shape[0]
    Kp = w_out_p.shape[1]

    nb = pl.cdiv(B, BB)
    Bp = nb * BB
    # Pad the batch with token-0 sentences (sliced off below); flatten to 1-D
    # so the SMEM footprint stays minimal.
    sent_flat = jnp.pad(sentences.astype(jnp.int32),
                        ((0, Bp - B), (0, 0))).reshape(-1)        # (Bp*T,)

    kernel = functools.partial(lstm_tagger_kernel, block_batch=BB, seq_len=T)

    out = pl.pallas_call(
        kernel,
        out_shape=jax.ShapeDtypeStruct((nb * BB * T, Kp), jnp.float32),
        grid_spec=pltpu.PrefetchScalarGridSpec(
            num_scalar_prefetch=1,                 # token ids -> SMEM
            grid=(nb,),
            in_specs=[
                pl.BlockSpec((V, G), lambda i, sent: (0, 0)),   # gx_table
                pl.BlockSpec((H, G), lambda i, sent: (0, 0)),   # W_hh^T
                pl.BlockSpec((H, Kp), lambda i, sent: (0, 0)),  # W_out^T
                pl.BlockSpec((1, Kp), lambda i, sent: (0, 0)),  # b_out
            ],
            out_specs=pl.BlockSpec((BB * T, Kp), lambda i, sent: (i, 0)),
        ),
        compiler_params=pltpu.CompilerParams(
            dimension_semantics=("parallel",)),    # v7x: shard blocks over 2 TCs
    )(sent_flat, gx_table, w_hh_t, w_out_p, b_out_p)

    # Kernel rows are t-major within each block (row = blk*BB*T + t*BB + b).
    out = out.reshape(nb, T, BB, Kp).transpose(0, 2, 1, 3).reshape(Bp, T, Kp)
    return out[:B, :, :K]


def lstm_tagger_forward(sentence, prepped):
    """Single-sentence forward matching the PyTorch module: (T,) -> (T, K)."""
    return lstm_tagger_forward_batched(sentence[None, :], prepped)[0]


def reference_forward(sentence, params):
    """Pure-JAX reference reproducing PyTorch semantics (unpadded)."""
    emb = params["embedding"][sentence]
    H = params["w_hh"].shape[1]
    h = jnp.zeros((1, H), jnp.float32)
    c = jnp.zeros((1, H), jnp.float32)
    outs = []
    for t in range(sentence.shape[0]):
        x = emb[t:t + 1]
        gates = x @ params["w_ih"].T + h @ params["w_hh"].T \
                + params["b_ih"] + params["b_hh"]
        i = jax.nn.sigmoid(gates[:, 0 * H:1 * H])
        f = jax.nn.sigmoid(gates[:, 1 * H:2 * H])
        g = jnp.tanh(gates[:, 2 * H:3 * H])
        o = jax.nn.sigmoid(gates[:, 3 * H:4 * H])
        c = f * c + i * g
        h = o * jnp.tanh(c)
        outs.append(h)
    lstm_out = jnp.concatenate(outs, axis=0)                     # (T, H)
    logits = lstm_out @ params["w_out"].T + params["b_out"]
    return jax.nn.log_softmax(logits, axis=1)


if __name__ == "__main__":
    EMBEDDING_DIM = 32
    HIDDEN_DIM = 32
    VOCAB_SIZE = 20
    TAGSET_SIZE = 8
    SEQ_LEN = 8
    BATCH = 16

    key = jax.random.PRNGKey(0)
    keys = jax.random.split(key, 9)
    s = 1.0 / np.sqrt(HIDDEN_DIM)  # PyTorch-style uniform init scale

    params = {
        "embedding": jax.random.normal(keys[0], (VOCAB_SIZE, EMBEDDING_DIM),
                                       jnp.float32),
        "w_ih": jax.random.uniform(keys[1], (4 * HIDDEN_DIM, EMBEDDING_DIM),
                                   jnp.float32, -s, s),
        "w_hh": jax.random.uniform(keys[2], (4 * HIDDEN_DIM, HIDDEN_DIM),
                                   jnp.float32, -s, s),
        "b_ih": jax.random.uniform(keys[3], (4 * HIDDEN_DIM,),
                                   jnp.float32, -s, s),
        "b_hh": jax.random.uniform(keys[4], (4 * HIDDEN_DIM,),
                                   jnp.float32, -s, s),
        "w_out": jax.random.uniform(keys[5], (TAGSET_SIZE, HIDDEN_DIM),
                                    jnp.float32, -s, s),
        "b_out": jax.random.uniform(keys[6], (TAGSET_SIZE,),
                                    jnp.float32, -s, s),
    }

    # One-time parameter prep (fused embedding/input projection, transposes,
    # output padding) — outside the per-call path.
    prepped = prepare_params(params)

    # ---- single-sentence forward (the original module's semantics) ----------
    sentence = jax.random.randint(keys[7], (SEQ_LEN,), 0, VOCAB_SIZE,
                                  dtype=jnp.int32)
    tag_scores = jax.block_until_ready(lstm_tagger_forward(sentence, prepped))
    ref_scores = jax.block_until_ready(reference_forward(sentence, params))
    assert tag_scores.shape == (SEQ_LEN, TAGSET_SIZE)
    np.testing.assert_allclose(np.asarray(tag_scores), np.asarray(ref_scores),
                               rtol=1e-5, atol=1e-5)

    # ---- batched forward (fills sublanes; grid=(2,) parallel over blocks) ----
    sentences = jax.random.randint(keys[8], (BATCH, SEQ_LEN), 0, VOCAB_SIZE,
                                   dtype=jnp.int32)
    batch_scores = jax.block_until_ready(
        lstm_tagger_forward_batched(sentences, prepped))
    ref_batch = jax.block_until_ready(
        jax.vmap(lambda snt: reference_forward(snt, params))(sentences))
    assert batch_scores.shape == (BATCH, SEQ_LEN, TAGSET_SIZE)
    np.testing.assert_allclose(np.asarray(batch_scores), np.asarray(ref_batch),
                               rtol=1e-5, atol=1e-5)

    print("KERNEL_OK")
</pallas_src>

<mosaic_0001>
module attributes {stable_mosaic.version = 11 : i64} {
  func.func @lstm_tagger_kernel(%arg0: i32, %arg1: memref<64xi32, #tpu.memory_space<smem>>, %arg2: memref<20x128xf32, #tpu.memory_space<vmem>>, %arg3: memref<32x128xf32, #tpu.memory_space<vmem>>, %arg4: memref<32x128xf32, #tpu.memory_space<vmem>>, %arg5: memref<1x128xf32, #tpu.memory_space<vmem>>, %arg6: memref<64x128xf32, #tpu.memory_space<vmem>>) attributes {dimension_semantics = [#tpu.dimension_semantics<parallel>], iteration_bounds = array<i64: 1>, scalar_prefetch = 1 : i64, scratch_operands = 0 : i64, tpu.core_type = #tpu.core_type<tc>, window_params = [{pipeline_mode = #tpu.pipeline_mode<synchronous>, transform_indices = @transform_0, window_bounds = array<i64: 20, 128>}, {pipeline_mode = #tpu.pipeline_mode<synchronous>, transform_indices = @transform_1, window_bounds = array<i64: 32, 128>}, {pipeline_mode = #tpu.pipeline_mode<synchronous>, transform_indices = @transform_2, window_bounds = array<i64: 32, 128>}, {pipeline_mode = #tpu.pipeline_mode<synchronous>, transform_indices = @transform_3, window_bounds = array<i64: 1, 128>}, {transform_indices = @transform_4, window_bounds = array<i64: 64, 128>}]} {
    %c64_i32 = arith.constant 64 : i32
    %0 = arith.muli %arg0, %c64_i32 : i32
    %c0 = arith.constant 0 : index
    %c0_0 = arith.constant 0 : index
    %1 = vector.load %arg3[%c0, %c0_0] : memref<32x128xf32, #tpu.memory_space<vmem>>, vector<32x128xf32>
    %cst = arith.constant 0.000000e+00 : f32
    %2 = vector.broadcast %cst : f32 to vector<8x32xf32>
    %cst_1 = arith.constant 0.000000e+00 : f32
    %3 = vector.broadcast %cst_1 : f32 to vector<8x32xf32>
    %c0_i32 = arith.constant 0 : i32
    %4 = arith.addi %0, %c0_i32 : i32
    %c0_i32_2 = arith.constant 0 : i32
    %5 = arith.addi %4, %c0_i32_2 : i32
    %6 = arith.index_cast %5 : i32 to index
    %7 = memref.load %arg1[%6] : memref<64xi32, #tpu.memory_space<smem>>
    %8 = arith.index_cast %7 : i32 to index
    %c0_3 = arith.constant 0 : index
    %9 = vector.load %arg2[%8, %c0_3] : memref<20x128xf32, #tpu.memory_space<vmem>>, vector<1x128xf32>
    %c8_i32 = arith.constant 8 : i32
    %10 = arith.addi %0, %c8_i32 : i32
    %c0_i32_4 = arith.constant 0 : i32
    %11 = arith.addi %10, %c0_i32_4 : i32
    %12 = arith.index_cast %11 : i32 to index
    %13 = memref.load %arg1[%12] : memref<64xi32, #tpu.memory_space<smem>>
    %14 = arith.index_cast %13 : i32 to index
    %c0_5 = arith.constant 0 : index
    %15 = vector.load %arg2[%14, %c0_5] : memref<20x128xf32, #tpu.memory_space<vmem>>, vector<1x128xf32>
    %c16_i32 = arith.constant 16 : i32
    %16 = arith.addi %0, %c16_i32 : i32
    %c0_i32_6 = arith.constant 0 : i32
    %17 = arith.addi %16, %c0_i32_6 : i32
    %18 = arith.index_cast %17 : i32 to index
    %19 = memref.load %arg1[%18] : memref<64xi32, #tpu.memory_space<smem>>
    %20 = arith.index_cast %19 : i32 to index
    %c0_7 = arith.constant 0 : index
    %21 = vector.load %arg2[%20, %c0_7] : memref<20x128xf32, #tpu.memory_space<vmem>>, vector<1x128xf32>
    %c24_i32 = arith.constant 24 : i32
    %22 = arith.addi %0, %c24_i32 : i32
    %c0_i32_8 = arith.constant 0 : i32
    %23 = arith.addi %22, %c0_i32_8 : i32
    %24 = arith.index_cast %23 : i32 to index
    %25 = memref.load %arg1[%24] : memref<64xi32, #tpu.memory_space<smem>>
    %26 = arith.index_cast %25 : i32 to index
    %c0_9 = arith.constant 0 : index
    %27 = vector.load %arg2[%26, %c0_9] : memref<20x128xf32, #tpu.memory_space<vmem>>, vector<1x128xf32>
    %c32_i32 = arith.constant 32 : i32
    %28 = arith.addi %0, %c32_i32 : i32
    %c0_i32_10 = arith.constant 0 : i32
    %29 = arith.addi %28, %c0_i32_10 : i32
    %30 = arith.index_cast %29 : i32 to index
    %31 = memref.load %arg1[%30] : memref<64xi32, #tpu.memory_space<smem>>
    %32 = arith.index_cast %31 : i32 to index
    %c0_11 = arith.constant 0 : index
    %33 = vector.load %arg2[%32, %c0_11] : memref<20x128xf32, #tpu.memory_space<vmem>>, vector<1x128xf32>
    %c40_i32 = arith.constant 40 : i32
    %34 = arith.addi %0, %c40_i32 : i32
    %c0_i32_12 = arith.constant 0 : i32
    %35 = arith.addi %34, %c0_i32_12 : i32
    %36 = arith.index_cast %35 : i32 to index
    %37 = memref.load %arg1[%36] : memref<64xi32, #tpu.memory_space<smem>>
    %38 = arith.index_cast %37 : i32 to index
    %c0_13 = arith.constant 0 : index
    %39 = vector.load %arg2[%38, %c0_13] : memref<20x128xf32, #tpu.memory_space<vmem>>, vector<1x128xf32>
    %c48_i32 = arith.constant 48 : i32
    %40 = arith.addi %0, %c48_i32 : i32
    %c0_i32_14 = arith.constant 0 : i32
    %41 = arith.addi %40, %c0_i32_14 : i32
    %42 = arith.index_cast %41 : i32 to index
    %43 = memref.load %arg1[%42] : memref<64xi32, #tpu.memory_space<smem>>
    %44 = arith.index_cast %43 : i32 to index
    %c0_15 = arith.constant 0 : index
    %45 = vector.load %arg2[%44, %c0_15] : memref<20x128xf32, #tpu.memory_space<vmem>>, vector<1x128xf32>
    %c56_i32 = arith.constant 56 : i32
    %46 = arith.addi %0, %c56_i32 : i32
    %c0_i32_16 = arith.constant 0 : i32
    %47 = arith.addi %46, %c0_i32_16 : i32
    %48 = arith.index_cast %47 : i32 to index
    %49 = memref.load %arg1[%48] : memref<64xi32, #tpu.memory_space<smem>>
    %50 = arith.index_cast %49 : i32 to index
    %c0_17 = arith.constant 0 : index
    %51 = vector.load %arg2[%50, %c0_17] : memref<20x128xf32, #tpu.memory_space<vmem>>, vector<1x128xf32>
    %52 = tpu.concatenate %9, %15, %21, %27, %33, %39, %45, %51 in 0 : vector<1x128xf32>, vector<1x128xf32>, vector<1x128xf32>, vector<1x128xf32>, vector<1x128xf32>, vector<1x128xf32>, vector<1x128xf32>, vector<1x128xf32> -> vector<8x128xf32>
    %cst_18 = arith.constant dense<0.000000e+00> : vector<8x128xf32>
    %53 = tpu.matmul %2, %1, %cst_18 {dimension_numbers = #tpu.dot_dimension_numbers<[1], [0], [0], [1], [0, 0, 1, 1], [], []>} : vector<8x32xf32>, vector<32x128xf32>, vector<8x128xf32> -> vector<8x128xf32>
    %54 = arith.addf %52, %53 : vector<8x128xf32>
    %55 = vector.extract_strided_slice %54 {offsets = [0, 0], sizes = [8, 32], strides = [1, 1]} : vector<8x128xf32> to vector<8x32xf32>
    %56 = arith.negf %55 : vector<8x32xf32>
    %57 = math.exp %56 : vector<8x32xf32>
    %cst_19 = arith.constant 1.000000e+00 : f32
    %58 = vector.broadcast %cst_19 : f32 to vector<8x32xf32>
    %59 = arith.addf %58, %57 : vector<8x32xf32>
    %60 = arith.divf %58, %59 : vector<8x32xf32>
    %61 = vector.extract_strided_slice %54 {offsets = [0, 32], sizes = [8, 32], strides = [1, 1]} : vector<8x128xf32> to vector<8x32xf32>
    %62 = arith.negf %61 : vector<8x32xf32>
    %63 = math.exp %62 : vector<8x32xf32>
    %cst_20 = arith.constant 1.000000e+00 : f32
    %64 = vector.broadcast %cst_20 : f32 to vector<8x32xf32>
    %65 = arith.addf %64, %63 : vector<8x32xf32>
    %66 = arith.divf %64, %65 : vector<8x32xf32>
    %67 = vector.extract_strided_slice %54 {offsets = [0, 64], sizes = [8, 32], strides = [1, 1]} : vector<8x128xf32> to vector<8x32xf32>
    %68 = math.tanh %67 : vector<8x32xf32>
    %69 = vector.extract_strided_slice %54 {offsets = [0, 96], sizes = [8, 32], strides = [1, 1]} : vector<8x128xf32> to vector<8x32xf32>
    %70 = arith.negf %69 : vector<8x32xf32>
    %71 = math.exp %70 : vector<8x32xf32>
    %cst_21 = arith.constant 1.000000e+00 : f32
    %72 = vector.broadcast %cst_21 : f32 to vector<8x32xf32>
    %73 = arith.addf %72, %71 : vector<8x32xf32>
    %74 = arith.divf %72, %73 : vector<8x32xf32>
    %75 = arith.mulf %66, %3 : vector<8x32xf32>
    %76 = arith.mulf %60, %68 : vector<8x32xf32>
    %77 = arith.addf %75, %76 : vector<8x32xf32>
    %78 = math.tanh %77 : vector<8x32xf32>
    %79 = arith.mulf %74, %78 : vector<8x32xf32>
    %c0_i32_22 = arith.constant 0 : i32
    %80 = arith.addi %0, %c0_i32_22 : i32
    %c1_i32 = arith.constant 1 : i32
    %81 = arith.addi %80, %c1_i32 : i32
    %82 = arith.index_cast %81 : i32 to index
    %83 = memref.load %arg1[%82] : memref<64xi32, #tpu.memory_space<smem>>
    %84 = arith.index_cast %83 : i32 to index
    %c0_23 = arith.constant 0 : index
    %85 = vector.load %arg2[%84, %c0_23] : memref<20x128xf32, #tpu.memory_space<vmem>>, vector<1x128xf32>
    %c8_i32_24 = arith.constant 8 : i32
    %86 = arith.addi %0, %c8_i32_24 : i32
    %c1_i32_25 = arith.constant 1 : i32
    %87 = arith.addi %86, %c1_i32_25 : i32
    %88 = arith.index_cast %87 : i32 to index
    %89 = memref.load %arg1[%88] : memref<64xi32, #tpu.memory_space<smem>>
    %90 = arith.index_cast %89 : i32 to index
    %c0_26 = arith.constant 0 : index
    %91 = vector.load %arg2[%90, %c0_26] : memref<20x128xf32, #tpu.memory_space<vmem>>, vector<1x128xf32>
    %c16_i32_27 = arith.constant 16 : i32
    %92 = arith.addi %0, %c16_i32_27 : i32
    %c1_i32_28 = arith.constant 1 : i32
    %93 = arith.addi %92, %c1_i32_28 : i32
    %94 = arith.index_cast %93 : i32 to index
    %95 = memref.load %arg1[%94] : memref<64xi32, #tpu.memory_space<smem>>
    %96 = arith.index_cast %95 : i32 to index
    %c0_29 = arith.constant 0 : index
    %97 = vector.load %arg2[%96, %c0_29] : memref<20x128xf32, #tpu.memory_space<vmem>>, vector<1x128xf32>
    %c24_i32_30 = arith.constant 24 : i32
    %98 = arith.addi %0, %c24_i32_30 : i32
    %c1_i32_31 = arith.constant 1 : i32
    %99 = arith.addi %98, %c1_i32_31 : i32
    %100 = arith.index_cast %99 : i32 to index
    %101 = memref.load %arg1[%100] : memref<64xi32, #tpu.memory_space<smem>>
    %102 = arith.index_cast %101 : i32 to index
    %c0_32 = arith.constant 0 : index
    %103 = vector.load %arg2[%102, %c0_32] : memref<20x128xf32, #tpu.memory_space<vmem>>, vector<1x128xf32>
    %c32_i32_33 = arith.constant 32 : i32
    %104 = arith.addi %0, %c32_i32_33 : i32
    %c1_i32_34 = arith.constant 1 : i32
    %105 = arith.addi %104, %c1_i32_34 : i32
    %106 = arith.index_cast %105 : i32 to index
    %107 = memref.load %arg1[%106] : memref<64xi32, #tpu.memory_space<smem>>
    %108 = arith.index_cast %107 : i32 to index
    %c0_35 = arith.constant 0 : index
    %109 = vector.load %arg2[%108, %c0_35] : memref<20x128xf32, #tpu.memory_space<vmem>>, vector<1x128xf32>
    %c40_i32_36 = arith.constant 40 : i32
    %110 = arith.addi %0, %c40_i32_36 : i32
    %c1_i32_37 = arith.constant 1 : i32
    %111 = arith.addi %110, %c1_i32_37 : i32
    %112 = arith.index_cast %111 : i32 to index
    %113 = memref.load %arg1[%112] : memref<64xi32, #tpu.memory_space<smem>>
    %114 = arith.index_cast %113 : i32 to index
    %c0_38 = arith.constant 0 : index
    %115 = vector.load %arg2[%114, %c0_38] : memref<20x128xf32, #tpu.memory_space<vmem>>, vector<1x128xf32>
    %c48_i32_39 = arith.constant 48 : i32
    %116 = arith.addi %0, %c48_i32_39 : i32
    %c1_i32_40 = arith.constant 1 : i32
    %117 = arith.addi %116, %c1_i32_40 : i32
    %118 = arith.index_cast %117 : i32 to index
    %119 = memref.load %arg1[%118] : memref<64xi32, #tpu.memory_space<smem>>
    %120 = arith.index_cast %119 : i32 to index
    %c0_41 = arith.constant 0 : index
    %121 = vector.load %arg2[%120, %c0_41] : memref<20x128xf32, #tpu.memory_space<vmem>>, vector<1x128xf32>
    %c56_i32_42 = arith.constant 56 : i32
    %122 = arith.addi %0, %c56_i32_42 : i32
    %c1_i32_43 = arith.constant 1 : i32
    %123 = arith.addi %122, %c1_i32_43 : i32
    %124 = arith.index_cast %123 : i32 to index
    %125 = memref.load %arg1[%124] : memref<64xi32, #tpu.memory_space<smem>>
    %126 = arith.index_cast %125 : i32 to index
    %c0_44 = arith.constant 0 : index
    %127 = vector.load %arg2[%126, %c0_44] : memref<20x128xf32, #tpu.memory_space<vmem>>, vector<1x128xf32>
    %128 = tpu.concatenate %85, %91, %97, %103, %109, %115, %121, %127 in 0 : vector<1x128xf32>, vector<1x128xf32>, vector<1x128xf32>, vector<1x128xf32>, vector<1x128xf32>, vector<1x128xf32>, vector<1x128xf32>, vector<1x128xf32> -> vector<8x128xf32>
    %cst_45 = arith.constant dense<0.000000e+00> : vector<8x128xf32>
    %129 = tpu.matmul %79, %1, %cst_45 {dimension_numbers = #tpu.dot_dimension_numbers<[1], [0], [0], [1], [0, 0, 1, 1], [], []>} : vector<8x32xf32>, vector<32x128xf32>, vector<8x128xf32> -> vector<8x128xf32>
    %130 = arith.addf %128, %129 : vector<8x128xf32>
    %131 = vector.extract_strided_slice %130 {offsets = [0, 0], sizes = [8, 32], strides = [1, 1]} : vector<8x128xf32> to vector<8x32xf32>
    %132 = arith.negf %131 : vector<8x32xf32>
    %133 = math.exp %132 : vector<8x32xf32>
    %cst_46 = arith.constant 1.000000e+00 : f32
    %134 = vector.broadcast %cst_46 : f32 to vector<8x32xf32>
    %135 = arith.addf %134, %133 : vector<8x32xf32>
    %136 = arith.divf %134, %135 : vector<8x32xf32>
    %137 = vector.extract_strided_slice %130 {offsets = [0, 32], sizes = [8, 32], strides = [1, 1]} : vector<8x128xf32> to vector<8x32xf32>
    %138 = arith.negf %137 : vector<8x32xf32>
    %139 = math.exp %138 : vector<8x32xf32>
    %cst_47 = arith.constant 1.000000e+00 : f32
    %140 = vector.broadcast %cst_47 : f32 to vector<8x32xf32>
    %141 = arith.addf %140, %139 : vector<8x32xf32>
    %142 = arith.divf %140, %141 : vector<8x32xf32>
    %143 = vector.extract_strided_slice %130 {offsets = [0, 64], sizes = [8, 32], strides = [1, 1]} : vector<8x128xf32> to vector<8x32xf32>
    %144 = math.tanh %143 : vector<8x32xf32>
    %145 = vector.extract_strided_slice %130 {offsets = [0, 96], sizes = [8, 32], strides = [1, 1]} : vector<8x128xf32> to vector<8x32xf32>
    %146 = arith.negf %145 : vector<8x32xf32>
    %147 = math.exp %146 : vector<8x32xf32>
    %cst_48 = arith.constant 1.000000e+00 : f32
    %148 = vector.broadcast %cst_48 : f32 to vector<8x32xf32>
    %149 = arith.addf %148, %147 : vector<8x32xf32>
    %150 = arith.divf %148, %149 : vector<8x32xf32>
    %151 = arith.mulf %142, %77 : vector<8x32xf32>
    %152 = arith.mulf %136, %144 : vector<8x32xf32>
    %153 = arith.addf %151, %152 : vector<8x32xf32>
    %154 = math.tanh %153 : vector<8x32xf32>
    %155 = arith.mulf %150, %154 : vector<8x32xf32>
    %c0_i32_49 = arith.constant 0 : i32
    %156 = arith.addi %0, %c0_i32_49 : i32
    %c2_i32 = arith.constant 2 : i32
    %157 = arith.addi %156, %c2_i32 : i32
    %158 = arith.index_cast %157 : i32 to index
    %159 = memref.load %arg1[%158] : memref<64xi32, #tpu.memory_space<smem>>
    %160 = arith.index_cast %159 : i32 to index
    %c0_50 = arith.constant 0 : index
    %161 = vector.load %arg2[%160, %c0_50] : memref<20x128xf32, #tpu.memory_space<vmem>>, vector<1x128xf32>
    %c8_i32_51 = arith.constant 8 : i32
    %162 = arith.addi %0, %c8_i32_51 : i32
    %c2_i32_52 = arith.constant 2 : i32
    %163 = arith.addi %162, %c2_i32_52 : i32
    %164 = arith.index_cast %163 : i32 to index
    %165 = memref.load %arg1[%164] : memref<64xi32, #tpu.memory_space<smem>>
    %166 = arith.index_cast %165 : i32 to index
    %c0_53 = arith.constant 0 : index
    %167 = vector.load %arg2[%166, %c0_53] : memref<20x128xf32, #tpu.memory_space<vmem>>, vector<1x128xf32>
    %c16_i32_54 = arith.constant 16 : i32
    %168 = arith.addi %0, %c16_i32_54 : i32
    %c2_i32_55 = arith.constant 2 : i32
    %169 = arith.addi %168, %c2_i32_55 : i32
    %170 = arith.index_cast %169 : i32 to index
    %171 = memref.load %arg1[%170] : memref<64xi32, #tpu.memory_space<smem>>
    %172 = arith.index_cast %171 : i32 to index
    %c0_56 = arith.constant 0 : index
    %173 = vector.load %arg2[%172, %c0_56] : memref<20x128xf32, #tpu.memory_space<vmem>>, vector<1x128xf32>
    %c24_i32_57 = arith.constant 24 : i32
    %174 = arith.addi %0, %c24_i32_57 : i32
    %c2_i32_58 = arith.constant 2 : i32
    %175 = arith.addi %174, %c2_i32_58 : i32
    %176 = arith.index_cast %175 : i32 to index
    %177 = memref.load %arg1[%176] : memref<64xi32, #tpu.memory_space<smem>>
    %178 = arith.index_cast %177 : i32 to index
    %c0_59 = arith.constant 0 : index
    %179 = vector.load %arg2[%178, %c0_59] : memref<20x128xf32, #tpu.memory_space<vmem>>, vector<1x128xf32>
    %c32_i32_60 = arith.constant 32 : i32
    %180 = arith.addi %0, %c32_i32_60 : i32
    %c2_i32_61 = arith.constant 2 : i32
    %181 = arith.addi %180, %c2_i32_61 : i32
    %182 = arith.index_cast %181 : i32 to index
    %183 = memref.load %arg1[%182] : memref<64xi32, #tpu.memory_space<smem>>
    %184 = arith.index_cast %183 : i32 to index
    %c0_62 = arith.constant 0 : index
    %185 = vector.load %arg2[%184, %c0_62] : memref<20x128xf32, #tpu.memory_space<vmem>>, vector<1x128xf32>
    %c40_i32_63 = arith.constant 40 : i32
    %186 = arith.addi %0, %c40_i32_63 : i32
    %c2_i32_64 = arith.constant 2 : i32
    %187 = arith.addi %186, %c2_i32_64 : i32
    %188 = arith.index_cast %187 : i32 to index
    %189 = memref.load %arg1[%188] : memref<64xi32, #tpu.memory_space<smem>>
    %190 = arith.index_cast %189 : i32 to index
    %c0_65 = arith.constant 0 : index
    %191 = vector.load %arg2[%190, %c0_65] : memref<20x128xf32, #tpu.memory_space<vmem>>, vector<1x128xf32>
    %c48_i32_66 = arith.constant 48 : i32
    %192 = arith.addi %0, %c48_i32_66 : i32
    %c2_i32_67 = arith.constant 2 : i32
    %193 = arith.addi %192, %c2_i32_67 : i32
    %194 = arith.index_cast %193 : i32 to index
    %195 = memref.load %arg1[%194] : memref<64xi32, #tpu.memory_space<smem>>
    %196 = arith.index_cast %195 : i32 to index
    %c0_68 = arith.constant 0 : index
    %197 = vector.load %arg2[%196, %c0_68] : memref<20x128xf32, #tpu.memory_space<vmem>>, vector<1x128xf32>
    %c56_i32_69 = arith.constant 56 : i32
    %198 = arith.addi %0, %c56_i32_69 : i32
    %c2_i32_70 = arith.constant 2 : i32
    %199 = arith.addi %198, %c2_i32_70 : i32
    %200 = arith.index_cast %199 : i32 to index
    %201 = memref.load %arg1[%200] : memref<64xi32, #tpu.memory_space<smem>>
    %202 = arith.index_cast %201 : i32 to index
    %c0_71 = arith.constant 0 : index
    %203 = vector.load %arg2[%202, %c0_71] : memref<20x128xf32, #tpu.memory_space<vmem>>, vector<1x128xf32>
    %204 = tpu.concatenate %161, %167, %173, %179, %185, %191, %197, %203 in 0 : vector<1x128xf32>, vector<1x128xf32>, vector<1x128xf32>, vector<1x128xf32>, vector<1x128xf32>, vector<1x128xf32>, vector<1x128xf32>, vector<1x128xf32> -> vector<8x128xf32>
    %cst_72 = arith.constant dense<0.000000e+00> : vector<8x128xf32>
    %205 = tpu.matmul %155, %1, %cst_72 {dimension_numbers = #tpu.dot_dimension_numbers<[1], [0], [0], [1], [0, 0, 1, 1], [], []>} : vector<8x32xf32>, vector<32x128xf32>, vector<8x128xf32> -> vector<8x128xf32>
    %206 = arith.addf %204, %205 : vector<8x128xf32>
    %207 = vector.extract_strided_slice %206 {offsets = [0, 0], sizes = [8, 32], strides = [1, 1]} : vector<8x128xf32> to vector<8x32xf32>
    %208 = arith.negf %207 : vector<8x32xf32>
    %209 = math.exp %208 : vector<8x32xf32>
    %cst_73 = arith.constant 1.000000e+00 : f32
    %210 = vector.broadcast %cst_73 : f32 to vector<8x32xf32>
    %211 = arith.addf %210, %209 : vector<8x32xf32>
    %212 = arith.divf %210, %211 : vector<8x32xf32>
    %213 = vector.extract_strided_slice %206 {offsets = [0, 32], sizes = [8, 32], strides = [1, 1]} : vector<8x128xf32> to vector<8x32xf32>
    %214 = arith.negf %213 : vector<8x32xf32>
    %215 = math.exp %214 : vector<8x32xf32>
    %cst_74 = arith.constant 1.000000e+00 : f32
    %216 = vector.broadcast %cst_74 : f32 to vector<8x32xf32>
    %217 = arith.addf %216, %215 : vector<8x32xf32>
    %218 = arith.divf %216, %217 : vector<8x32xf32>
    %219 = vector.extract_strided_slice %206 {offsets = [0, 64], sizes = [8, 32], strides = [1, 1]} : vector<8x128xf32> to vector<8x32xf32>
    %220 = math.tanh %219 : vector<8x32xf32>
    %221 = vector.extract_strided_slice %206 {offsets = [0, 96], sizes = [8, 32], strides = [1, 1]} : vector<8x128xf32> to vector<8x32xf32>
    %222 = arith.negf %221 : vector<8x32xf32>
    %223 = math.exp %222 : vector<8x32xf32>
    %cst_75 = arith.constant 1.000000e+00 : f32
    %224 = vector.broadcast %cst_75 : f32 to vector<8x32xf32>
    %225 = arith.addf %224, %223 : vector<8x32xf32>
    %226 = arith.divf %224, %225 : vector<8x32xf32>
    %227 = arith.mulf %218, %153 : vector<8x32xf32>
    %228 = arith.mulf %212, %220 : vector<8x32xf32>
    %229 = arith.addf %227, %228 : vector<8x32xf32>
    %230 = math.tanh %229 : vector<8x32xf32>
    %231 = arith.mulf %226, %230 : vector<8x32xf32>
    %c0_i32_76 = arith.constant 0 : i32
    %232 = arith.addi %0, %c0_i32_76 : i32
    %c3_i32 = arith.constant 3 : i32
    %233 = arith.addi %232, %c3_i32 : i32
    %234 = arith.index_cast %233 : i32 to index
    %235 = memref.load %arg1[%234] : memref<64xi32, #tpu.memory_space<smem>>
    %236 = arith.index_cast %235 : i32 to index
    %c0_77 = arith.constant 0 : index
    %237 = vector.load %arg2[%236, %c0_77] : memref<20x128xf32, #tpu.memory_space<vmem>>, vector<1x128xf32>
    %c8_i32_78 = arith.constant 8 : i32
    %238 = arith.addi %0, %c8_i32_78 : i32
    %c3_i32_79 = arith.constant 3 : i32
    %239 = arith.addi %238, %c3_i32_79 : i32
    %240 = arith.index_cast %239 : i32 to index
    %241 = memref.load %arg1[%240] : memref<64xi32, #tpu.memory_space<smem>>
    %242 = arith.index_cast %241 : i32 to index
    %c0_80 = arith.constant 0 : index
    %243 = vector.load %arg2[%242, %c0_80] : memref<20x128xf32, #tpu.memory_space<vmem>>, vector<1x128xf32>
    %c16_i32_81 = arith.constant 16 : i32
    %244 = arith.addi %0, %c16_i32_81 : i32
    %c3_i32_82 = arith.constant 3 : i32
    %245 = arith.addi %244, %c3_i32_82 : i32
    %246 = arith.index_cast %245 : i32 to index
    %247 = memref.load %arg1[%246] : memref<64xi32, #tpu.memory_space<smem>>
    %248 = arith.index_cast %247 : i32 to index
    %c0_83 = arith.constant 0 : index
    %249 = vector.load %arg2[%248, %c0_83] : memref<20x128xf32, #tpu.memory_space<vmem>>, vector<1x128xf32>
    %c24_i32_84 = arith.constant 24 : i32
    %250 = arith.addi %0, %c24_i32_84 : i32
    %c3_i32_85 = arith.constant 3 : i32
    %251 = arith.addi %250, %c3_i32_85 : i32
    %252 = arith.index_cast %251 : i32 to index
    %253 = memref.load %arg1[%252] : memref<64xi32, #tpu.memory_space<smem>>
    %254 = arith.index_cast %253 : i32 to index
    %c0_86 = arith.constant 0 : index
    %255 = vector.load %arg2[%254, %c0_86] : memref<20x128xf32, #tpu.memory_space<vmem>>, vector<1x128xf32>
    %c32_i32_87 = arith.constant 32 : i32
    %256 = arith.addi %0, %c32_i32_87 : i32
    %c3_i32_88 = arith.constant 3 : i32
    %257 = arith.addi %256, %c3_i32_88 : i32
    %258 = arith.index_cast %257 : i32 to index
    %259 = memref.load %arg1[%258] : memref<64xi32, #tpu.memory_space<smem>>
    %260 = arith.index_cast %259 : i32 to index
    %c0_89 = arith.constant 0 : index
    %261 = vector.load %arg2[%260, %c0_89] : memref<20x128xf32, #tpu.memory_space<vmem>>, vector<1x128xf32>
    %c40_i32_90 = arith.constant 40 : i32
    %262 = arith.addi %0, %c40_i32_90 : i32
    %c3_i32_91 = arith.constant 3 : i32
    %263 = arith.addi %262, %c3_i32_91 : i32
    %264 = arith.index_cast %263 : i32 to index
    %265 = memref.load %arg1[%264] : memref<64xi32, #tpu.memory_space<smem>>
    %266 = arith.index_cast %265 : i32 to index
    %c0_92 = arith.constant 0 : index
    %267 = vector.load %arg2[%266, %c0_92] : memref<20x128xf32, #tpu.memory_space<vmem>>, vector<1x128xf32>
    %c48_i32_93 = arith.constant 48 : i32
    %268 = arith.addi %0, %c48_i32_93 : i32
    %c3_i32_94 = arith.constant 3 : i32
    %269 = arith.addi %268, %c3_i32_94 : i32
    %270 = arith.index_cast %269 : i32 to index
    %271 = memref.load %arg1[%270] : memref<64xi32, #tpu.memory_space<smem>>
    %272 = arith.index_cast %271 : i32 to index
    %c0_95 = arith.constant 0 : index
    %273 = vector.load %arg2[%272, %c0_95] : memref<20x128xf32, #tpu.memory_space<vmem>>, vector<1x128xf32>
    %c56_i32_96 = arith.constant 56 : i32
    %274 = arith.addi %0, %c56_i32_96 : i32
    %c3_i32_97 = arith.constant 3 : i32
    %275 = arith.addi %274, %c3_i32_97 : i32
    %276 = arith.index_cast %275 : i32 to index
    %277 = memref.load %arg1[%276] : memref<64xi32, #tpu.memory_space<smem>>
    %278 = arith.index_cast %277 : i32 to index
    %c0_98 = arith.constant 0 : index
    %279 = vector.load %arg2[%278, %c0_98] : memref<20x128xf32, #tpu.memory_space<vmem>>, vector<1x128xf32>
    %280 = tpu.concatenate %237, %243, %249, %255, %261, %267, %273, %279 in 0 : vector<1x128xf32>, vector<1x128xf32>, vector<1x128xf32>, vector<1x128xf32>, vector<1x128xf32>, vector<1x128xf32>, vector<1x128xf32>, vector<1x128xf32> -> vector<8x128xf32>
    %cst_99 = arith.constant dense<0.000000e+00> : vector<8x128xf32>
    %281 = tpu.matmul %231, %1, %cst_99 {dimension_numbers = #tpu.dot_dimension_numbers<[1], [0], [0], [1], [0, 0, 1, 1], [], []>} : vector<8x32xf32>, vector<32x128xf32>, vector<8x128xf32> -> vector<8x128xf32>
    %282 = arith.addf %280, %281 : vector<8x128xf32>
    %283 = vector.extract_strided_slice %282 {offsets = [0, 0], sizes = [8, 32], strides = [1, 1]} : vector<8x128xf32> to vector<8x32xf32>
    %284 = arith.negf %283 : vector<8x32xf32>
    %285 = math.exp %284 : vector<8x32xf32>
    %cst_100 = arith.constant 1.000000e+00 : f32
    %286 = vector.broadcast %cst_100 : f32 to vector<8x32xf32>
    %287 = arith.addf %286, %285 : vector<8x32xf32>
    %288 = arith.divf %286, %287 : vector<8x32xf32>
    %289 = vector.extract_strided_slice %282 {offsets = [0, 32], sizes = [8, 32], strides = [1, 1]} : vector<8x128xf32> to vector<8x32xf32>
    %290 = arith.negf %289 : vector<8x32xf32>
    %291 = math.exp %290 : vector<8x32xf32>
    %cst_101 = arith.constant 1.000000e+00 : f32
    %292 = vector.broadcast %cst_101 : f32 to vector<8x32xf32>
    %293 = arith.addf %292, %291 : vector<8x32xf32>
    %294 = arith.divf %292, %293 : vector<8x32xf32>
    %295 = vector.extract_strided_slice %282 {offsets = [0, 64], sizes = [8, 32], strides = [1, 1]} : vector<8x128xf32> to vector<8x32xf32>
    %296 = math.tanh %295 : vector<8x32xf32>
    %297 = vector.extract_strided_slice %282 {offsets = [0, 96], sizes = [8, 32], strides = [1, 1]} : vector<8x128xf32> to vector<8x32xf32>
    %298 = arith.negf %297 : vector<8x32xf32>
    %299 = math.exp %298 : vector<8x32xf32>
    %cst_102 = arith.constant 1.000000e+00 : f32
    %300 = vector.broadcast %cst_102 : f32 to vector<8x32xf32>
    %301 = arith.addf %300, %299 : vector<8x32xf32>
    %302 = arith.divf %300, %301 : vector<8x32xf32>
    %303 = arith.mulf %294, %229 : vector<8x32xf32>
    %304 = arith.mulf %288, %296 : vector<8x32xf32>
    %305 = arith.addf %303, %304 : vector<8x32xf32>
    %306 = math.tanh %305 : vector<8x32xf32>
    %307 = arith.mulf %302, %306 : vector<8x32xf32>
    %c0_i32_103 = arith.constant 0 : i32
    %308 = arith.addi %0, %c0_i32_103 : i32
    %c4_i32 = arith.constant 4 : i32
    %309 = arith.addi %308, %c4_i32 : i32
    %310 = arith.index_cast %309 : i32 to index
    %311 = memref.load %arg1[%310] : memref<64xi32, #tpu.memory_space<smem>>
    %312 = arith.index_cast %311 : i32 to index
    %c0_104 = arith.constant 0 : index
    %313 = vector.load %arg2[%312, %c0_104] : memref<20x128xf32, #tpu.memory_space<vmem>>, vector<1x128xf32>
    %c8_i32_105 = arith.constant 8 : i32
    %314 = arith.addi %0, %c8_i32_105 : i32
    %c4_i32_106 = arith.constant 4 : i32
    %315 = arith.addi %314, %c4_i32_106 : i32
    %316 = arith.index_cast %315 : i32 to index
    %317 = memref.load %arg1[%316] : memref<64xi32, #tpu.memory_space<smem>>
    %318 = arith.index_cast %317 : i32 to index
    %c0_107 = arith.constant 0 : index
    %319 = vector.load %arg2[%318, %c0_107] : memref<20x128xf32, #tpu.memory_space<vmem>>, vector<1x128xf32>
    %c16_i32_108 = arith.constant 16 : i32
    %320 = arith.addi %0, %c16_i32_108 : i32
    %c4_i32_109 = arith.constant 4 : i32
    %321 = arith.addi %320, %c4_i32_109 : i32
    %322 = arith.index_cast %321 : i32 to index
    %323 = memref.load %arg1[%322] : memref<64xi32, #tpu.memory_space<smem>>
    %324 = arith.index_cast %323 : i32 to index
    %c0_110 = arith.constant 0 : index
    %325 = vector.load %arg2[%324, %c0_110] : memref<20x128xf32, #tpu.memory_space<vmem>>, vector<1x128xf32>
    %c24_i32_111 = arith.constant 24 : i32
    %326 = arith.addi %0, %c24_i32_111 : i32
    %c4_i32_112 = arith.constant 4 : i32
    %327 = arith.addi %326, %c4_i32_112 : i32
    %328 = arith.index_cast %327 : i32 to index
    %329 = memref.load %arg1[%328] : memref<64xi32, #tpu.memory_space<smem>>
    %330 = arith.index_cast %329 : i32 to index
    %c0_113 = arith.constant 0 : index
    %331 = vector.load %arg2[%330, %c0_113] : memref<20x128xf32, #tpu.memory_space<vmem>>, vector<1x128xf32>
    %c32_i32_114 = arith.constant 32 : i32
    %332 = arith.addi %0, %c32_i32_114 : i32
    %c4_i32_115 = arith.constant 4 : i32
    %333 = arith.addi %332, %c4_i32_115 : i32
    %334 = arith.index_cast %333 : i32 to index
    %335 = memref.load %arg1[%334] : memref<64xi32, #tpu.memory_space<smem>>
    %336 = arith.index_cast %335 : i32 to index
    %c0_116 = arith.constant 0 : index
    %337 = vector.load %arg2[%336, %c0_116] : memref<20x128xf32, #tpu.memory_space<vmem>>, vector<1x128xf32>
    %c40_i32_117 = arith.constant 40 : i32
    %338 = arith.addi %0, %c40_i32_117 : i32
    %c4_i32_118 = arith.constant 4 : i32
    %339 = arith.addi %338, %c4_i32_118 : i32
    %340 = arith.index_cast %339 : i32 to index
    %341 = memref.load %arg1[%340] : memref<64xi32, #tpu.memory_space<smem>>
    %342 = arith.index_cast %341 : i32 to index
    %c0_119 = arith.constant 0 : index
    %343 = vector.load %arg2[%342, %c0_119] : memref<20x128xf32, #tpu.memory_space<vmem>>, vector<1x128xf32>
    %c48_i32_120 = arith.constant 48 : i32
    %344 = arith.addi %0, %c48_i32_120 : i32
    %c4_i32_121 = arith.constant 4 : i32
    %345 = arith.addi %344, %c4_i32_121 : i32
    %346 = arith.index_cast %345 : i32 to index
    %347 = memref.load %arg1[%346] : memref<64xi32, #tpu.memory_space<smem>>
    %348 = arith.index_cast %347 : i32 to index
    %c0_122 = arith.constant 0 : index
    %349 = vector.load %arg2[%348, %c0_122] : memref<20x128xf32, #tpu.memory_space<vmem>>, vector<1x128xf32>
    %c56_i32_123 = arith.constant 56 : i32
    %350 = arith.addi %0, %c56_i32_123 : i32
    %c4_i32_124 = arith.constant 4 : i32
    %351 = arith.addi %350, %c4_i32_124 : i32
    %352 = arith.index_cast %351 : i32 to index
    %353 = memref.load %arg1[%352] : memref<64xi32, #tpu.memory_space<smem>>
    %354 = arith.index_cast %353 : i32 to index
    %c0_125 = arith.constant 0 : index
    %355 = vector.load %arg2[%354, %c0_125] : memref<20x128xf32, #tpu.memory_space<vmem>>, vector<1x128xf32>
    %356 = tpu.concatenate %313, %319, %325, %331, %337, %343, %349, %355 in 0 : vector<1x128xf32>, vector<1x128xf32>, vector<1x128xf32>, vector<1x128xf32>, vector<1x128xf32>, vector<1x128xf32>, vector<1x128xf32>, vector<1x128xf32> -> vector<8x128xf32>
    %cst_126 = arith.constant dense<0.000000e+00> : vector<8x128xf32>
    %357 = tpu.matmul %307, %1, %cst_126 {dimension_numbers = #tpu.dot_dimension_numbers<[1], [0], [0], [1], [0, 0, 1, 1], [], []>} : vector<8x32xf32>, vector<32x128xf32>, vector<8x128xf32> -> vector<8x128xf32>
    %358 = arith.addf %356, %357 : vector<8x128xf32>
    %359 = vector.extract_strided_slice %358 {offsets = [0, 0], sizes = [8, 32], strides = [1, 1]} : vector<8x128xf32> to vector<8x32xf32>
    %360 = arith.negf %359 : vector<8x32xf32>
    %361 = math.exp %360 : vector<8x32xf32>
    %cst_127 = arith.constant 1.000000e+00 : f32
    %362 = vector.broadcast %cst_127 : f32 to vector<8x32xf32>
    %363 = arith.addf %362, %361 : vector<8x32xf32>
    %364 = arith.divf %362, %363 : vector<8x32xf32>
    %365 = vector.extract_strided_slice %358 {offsets = [0, 32], sizes = [8, 32], strides = [1, 1]} : vector<8x128xf32> to vector<8x32xf32>
    %366 = arith.negf %365 : vector<8x32xf32>
    %367 = math.exp %366 : vector<8x32xf32>
    %cst_128 = arith.constant 1.000000e+00 : f32
    %368 = vector.broadcast %cst_128 : f32 to vector<8x32xf32>
    %369 = arith.addf %368, %367 : vector<8x32xf32>
    %370 = arith.divf %368, %369 : vector<8x32xf32>
    %371 = vector.extract_strided_slice %358 {offsets = [0, 64], sizes = [8, 32], strides = [1, 1]} : vector<8x128xf32> to vector<8x32xf32>
    %372 = math.tanh %371 : vector<8x32xf32>
    %373 = vector.extract_strided_slice %358 {offsets = [0, 96], sizes = [8, 32], strides = [1, 1]} : vector<8x128xf32> to vector<8x32xf32>
    %374 = arith.negf %373 : vector<8x32xf32>
    %375 = math.exp %374 : vector<8x32xf32>
    %cst_129 = arith.constant 1.000000e+00 : f32
    %376 = vector.broadcast %cst_129 : f32 to vector<8x32xf32>
    %377 = arith.addf %376, %375 : vector<8x32xf32>
    %378 = arith.divf %376, %377 : vector<8x32xf32>
    %379 = arith.mulf %370, %305 : vector<8x32xf32>
    %380 = arith.mulf %364, %372 : vector<8x32xf32>
    %381 = arith.addf %379, %380 : vector<8x32xf32>
    %382 = math.tanh %381 : vector<8x32xf32>
    %383 = arith.mulf %378, %382 : vector<8x32xf32>
    %c0_i32_130 = arith.constant 0 : i32
    %384 = arith.addi %0, %c0_i32_130 : i32
    %c5_i32 = arith.constant 5 : i32
    %385 = arith.addi %384, %c5_i32 : i32
    %386 = arith.index_cast %385 : i32 to index
    %387 = memref.load %arg1[%386] : memref<64xi32, #tpu.memory_space<smem>>
    %388 = arith.index_cast %387 : i32 to index
    %c0_131 = arith.constant 0 : index
    %389 = vector.load %arg2[%388, %c0_131] : memref<20x128xf32, #tpu.memory_space<vmem>>, vector<1x128xf32>
    %c8_i32_132 = arith.constant 8 : i32
    %390 = arith.addi %0, %c8_i32_132 : i32
    %c5_i32_133 = arith.constant 5 : i32
    %391 = arith.addi %390, %c5_i32_133 : i32
    %392 = arith.index_cast %391 : i32 to index
    %393 = memref.load %arg1[%392] : memref<64xi32, #tpu.memory_space<smem>>
    %394 = arith.index_cast %393 : i32 to index
    %c0_134 = arith.constant 0 : index
    %395 = vector.load %arg2[%394, %c0_134] : memref<20x128xf32, #tpu.memory_space<vmem>>, vector<1x128xf32>
    %c16_i32_135 = arith.constant 16 : i32
    %396 = arith.addi %0, %c16_i32_135 : i32
    %c5_i32_136 = arith.constant 5 : i32
    %397 = arith.addi %396, %c5_i32_136 : i32
    %398 = arith.index_cast %397 : i32 to index
    %399 = memref.load %arg1[%398] : memref<64xi32, #tpu.memory_space<smem>>
    %400 = arith.index_cast %399 : i32 to index
    %c0_137 = arith.constant 0 : index
    %401 = vector.load %arg2[%400, %c0_137] : memref<20x128xf32, #tpu.memory_space<vmem>>, vector<1x128xf32>
    %c24_i32_138 = arith.constant 24 : i32
    %402 = arith.addi %0, %c24_i32_138 : i32
    %c5_i32_139 = arith.constant 5 : i32
    %403 = arith.addi %402, %c5_i32_139 : i32
    %404 = arith.index_cast %403 : i32 to index
    %405 = memref.load %arg1[%404] : memref<64xi32, #tpu.memory_space<smem>>
    %406 = arith.index_cast %405 : i32 to index
    %c0_140 = arith.constant 0 : index
    %407 = vector.load %arg2[%406, %c0_140] : memref<20x128xf32, #tpu.memory_space<vmem>>, vector<1x128xf32>
    %c32_i32_141 = arith.constant 32 : i32
    %408 = arith.addi %0, %c32_i32_141 : i32
    %c5_i32_142 = arith.constant 5 : i32
    %409 = arith.addi %408, %c5_i32_142 : i32
    %410 = arith.index_cast %409 : i32 to index
    %411 = memref.load %arg1[%410] : memref<64xi32, #tpu.memory_space<smem>>
    %412 = arith.index_cast %411 : i32 to index
    %c0_143 = arith.constant 0 : index
    %413 = vector.load %arg2[%412, %c0_143] : memref<20x128xf32, #tpu.memory_space<vmem>>, vector<1x128xf32>
    %c40_i32_144 = arith.constant 40 : i32
    %414 = arith.addi %0, %c40_i32_144 : i32
    %c5_i32_145 = arith.constant 5 : i32
    %415 = arith.addi %414, %c5_i32_145 : i32
    %416 = arith.index_cast %415 : i32 to index
    %417 = memref.load %arg1[%416] : memref<64xi32, #tpu.memory_space<smem>>
    %418 = arith.index_cast %417 : i32 to index
    %c0_146 = arith.constant 0 : index
    %419 = vector.load %arg2[%418, %c0_146] : memref<20x128xf32, #tpu.memory_space<vmem>>, vector<1x128xf32>
    %c48_i32_147 = arith.constant 48 : i32
    %420 = arith.addi %0, %c48_i32_147 : i32
    %c5_i32_148 = arith.constant 5 : i32
    %421 = arith.addi %420, %c5_i32_148 : i32
    %422 = arith.index_cast %421 : i32 to index
    %423 = memref.load %arg1[%422] : memref<64xi32, #tpu.memory_space<smem>>
    %424 = arith.index_cast %423 : i32 to index
    %c0_149 = arith.constant 0 : index
    %425 = vector.load %arg2[%424, %c0_149] : memref<20x128xf32, #tpu.memory_space<vmem>>, vector<1x128xf32>
    %c56_i32_150 = arith.constant 56 : i32
    %426 = arith.addi %0, %c56_i32_150 : i32
    %c5_i32_151 = arith.constant 5 : i32
    %427 = arith.addi %426, %c5_i32_151 : i32
    %428 = arith.index_cast %427 : i32 to index
    %429 = memref.load %arg1[%428] : memref<64xi32, #tpu.memory_space<smem>>
    %430 = arith.index_cast %429 : i32 to index
    %c0_152 = arith.constant 0 : index
    %431 = vector.load %arg2[%430, %c0_152] : memref<20x128xf32, #tpu.memory_space<vmem>>, vector<1x128xf32>
    %432 = tpu.concatenate %389, %395, %401, %407, %413, %419, %425, %431 in 0 : vector<1x128xf32>, vector<1x128xf32>, vector<1x128xf32>, vector<1x128xf32>, vector<1x128xf32>, vector<1x128xf32>, vector<1x128xf32>, vector<1x128xf32> -> vector<8x128xf32>
    %cst_153 = arith.constant dense<0.000000e+00> : vector<8x128xf32>
    %433 = tpu.matmul %383, %1, %cst_153 {dimension_numbers = #tpu.dot_dimension_numbers<[1], [0], [0], [1], [0, 0, 1, 1], [], []>} : vector<8x32xf32>, vector<32x128xf32>, vector<8x128xf32> -> vector<8x128xf32>
    %434 = arith.addf %432, %433 : vector<8x128xf32>
    %435 = vector.extract_strided_slice %434 {offsets = [0, 0], sizes = [8, 32], strides = [1, 1]} : vector<8x128xf32> to vector<8x32xf32>
    %436 = arith.negf %435 : vector<8x32xf32>
    %437 = math.exp %436 : vector<8x32xf32>
    %cst_154 = arith.constant 1.000000e+00 : f32
    %438 = vector.broadcast %cst_154 : f32 to vector<8x32xf32>
    %439 = arith.addf %438, %437 : vector<8x32xf32>
    %440 = arith.divf %438, %439 : vector<8x32xf32>
    %441 = vector.extract_strided_slice %434 {offsets = [0, 32], sizes = [8, 32], strides = [1, 1]} : vector<8x128xf32> to vector<8x32xf32>
    %442 = arith.negf %441 : vector<8x32xf32>
    %443 = math.exp %442 : vector<8x32xf32>
    %cst_155 = arith.constant 1.000000e+00 : f32
    %444 = vector.broadcast %cst_155 : f32 to vector<8x32xf32>
    %445 = arith.addf %444, %443 : vector<8x32xf32>
    %446 = arith.divf %444, %445 : vector<8x32xf32>
    %447 = vector.extract_strided_slice %434 {offsets = [0, 64], sizes = [8, 32], strides = [1, 1]} : vector<8x128xf32> to vector<8x32xf32>
    %448 = math.tanh %447 : vector<8x32xf32>
    %449 = vector.extract_strided_slice %434 {offsets = [0, 96], sizes = [8, 32], strides = [1, 1]} : vector<8x128xf32> to vector<8x32xf32>
    %450 = arith.negf %449 : vector<8x32xf32>
    %451 = math.exp %450 : vector<8x32xf32>
    %cst_156 = arith.constant 1.000000e+00 : f32
    %452 = vector.broadcast %cst_156 : f32 to vector<8x32xf32>
    %453 = arith.addf %452, %451 : vector<8x32xf32>
    %454 = arith.divf %452, %453 : vector<8x32xf32>
    %455 = arith.mulf %446, %381 : vector<8x32xf32>
    %456 = arith.mulf %440, %448 : vector<8x32xf32>
    %457 = arith.addf %455, %456 : vector<8x32xf32>
    %458 = math.tanh %457 : vector<8x32xf32>
    %459 = arith.mulf %454, %458 : vector<8x32xf32>
    %c0_i32_157 = arith.constant 0 : i32
    %460 = arith.addi %0, %c0_i32_157 : i32
    %c6_i32 = arith.constant 6 : i32
    %461 = arith.addi %460, %c6_i32 : i32
    %462 = arith.index_cast %461 : i32 to index
    %463 = memref.load %arg1[%462] : memref<64xi32, #tpu.memory_space<smem>>
    %464 = arith.index_cast %463 : i32 to index
    %c0_158 = arith.constant 0 : index
    %465 = vector.load %arg2[%464, %c0_158] : memref<20x128xf32, #tpu.memory_space<vmem>>, vector<1x128xf32>
    %c8_i32_159 = arith.constant 8 : i32
    %466 = arith.addi %0, %c8_i32_159 : i32
    %c6_i32_160 = arith.constant 6 : i32
    %467 = arith.addi %466, %c6_i32_160 : i32
    %468 = arith.index_cast %467 : i32 to index
    %469 = memref.load %arg1[%468] : memref<64xi32, #tpu.memory_space<smem>>
    %470 = arith.index_cast %469 : i32 to index
    %c0_161 = arith.constant 0 : index
    %471 = vector.load %arg2[%470, %c0_161] : memref<20x128xf32, #tpu.memory_space<vmem>>, vector<1x128xf32>
    %c16_i32_162 = arith.constant 16 : i32
    %472 = arith.addi %0, %c16_i32_162 : i32
    %c6_i32_163 = arith.constant 6 : i32
    %473 = arith.addi %472, %c6_i32_163 : i32
    %474 = arith.index_cast %473 : i32 to index
    %475 = memref.load %arg1[%474] : memref<64xi32, #tpu.memory_space<smem>>
    %476 = arith.index_cast %475 : i32 to index
    %c0_164 = arith.constant 0 : index
    %477 = vector.load %arg2[%476, %c0_164] : memref<20x128xf32, #tpu.memory_space<vmem>>, vector<1x128xf32>
    %c24_i32_165 = arith.constant 24 : i32
    %478 = arith.addi %0, %c24_i32_165 : i32
    %c6_i32_166 = arith.constant 6 : i32
    %479 = arith.addi %478, %c6_i32_166 : i32
    %480 = arith.index_cast %479 : i32 to index
    %481 = memref.load %arg1[%480] : memref<64xi32, #tpu.memory_space<smem>>
    %482 = arith.index_cast %481 : i32 to index
    %c0_167 = arith.constant 0 : index
    %483 = vector.load %arg2[%482, %c0_167] : memref<20x128xf32, #tpu.memory_space<vmem>>, vector<1x128xf32>
    %c32_i32_168 = arith.constant 32 : i32
    %484 = arith.addi %0, %c32_i32_168 : i32
    %c6_i32_169 = arith.constant 6 : i32
    %485 = arith.addi %484, %c6_i32_169 : i32
    %486 = arith.index_cast %485 : i32 to index
    %487 = memref.load %arg1[%486] : memref<64xi32, #tpu.memory_space<smem>>
    %488 = arith.index_cast %487 : i32 to index
    %c0_170 = arith.constant 0 : index
    %489 = vector.load %arg2[%488, %c0_170] : memref<20x128xf32, #tpu.memory_space<vmem>>, vector<1x128xf32>
    %c40_i32_171 = arith.constant 40 : i32
    %490 = arith.addi %0, %c40_i32_171 : i32
    %c6_i32_172 = arith.constant 6 : i32
    %491 = arith.addi %490, %c6_i32_172 : i32
    %492 = arith.index_cast %491 : i32 to index
    %493 = memref.load %arg1[%492] : memref<64xi32, #tpu.memory_space<smem>>
    %494 = arith.index_cast %493 : i32 to index
    %c0_173 = arith.constant 0 : index
    %495 = vector.load %arg2[%494, %c0_173] : memref<20x128xf32, #tpu.memory_space<vmem>>, vector<1x128xf32>
    %c48_i32_174 = arith.constant 48 : i32
    %496 = arith.addi %0, %c48_i32_174 : i32
    %c6_i32_175 = arith.constant 6 : i32
    %497 = arith.addi %496, %c6_i32_175 : i32
    %498 = arith.index_cast %497 : i32 to index
    %499 = memref.load %arg1[%498] : memref<64xi32, #tpu.memory_space<smem>>
    %500 = arith.index_cast %499 : i32 to index
    %c0_176 = arith.constant 0 : index
    %501 = vector.load %arg2[%500, %c0_176] : memref<20x128xf32, #tpu.memory_space<vmem>>, vector<1x128xf32>
    %c56_i32_177 = arith.constant 56 : i32
    %502 = arith.addi %0, %c56_i32_177 : i32
    %c6_i32_178 = arith.constant 6 : i32
    %503 = arith.addi %502, %c6_i32_178 : i32
    %504 = arith.index_cast %503 : i32 to index
    %505 = memref.load %arg1[%504] : memref<64xi32, #tpu.memory_space<smem>>
    %506 = arith.index_cast %505 : i32 to index
    %c0_179 = arith.constant 0 : index
    %507 = vector.load %arg2[%506, %c0_179] : memref<20x128xf32, #tpu.memory_space<vmem>>, vector<1x128xf32>
    %508 = tpu.concatenate %465, %471, %477, %483, %489, %495, %501, %507 in 0 : vector<1x128xf32>, vector<1x128xf32>, vector<1x128xf32>, vector<1x128xf32>, vector<1x128xf32>, vector<1x128xf32>, vector<1x128xf32>, vector<1x128xf32> -> vector<8x128xf32>
    %cst_180 = arith.constant dense<0.000000e+00> : vector<8x128xf32>
    %509 = tpu.matmul %459, %1, %cst_180 {dimension_numbers = #tpu.dot_dimension_numbers<[1], [0], [0], [1], [0, 0, 1, 1], [], []>} : vector<8x32xf32>, vector<32x128xf32>, vector<8x128xf32> -> vector<8x128xf32>
    %510 = arith.addf %508, %509 : vector<8x128xf32>
    %511 = vector.extract_strided_slice %510 {offsets = [0, 0], sizes = [8, 32], strides = [1, 1]} : vector<8x128xf32> to vector<8x32xf32>
    %512 = arith.negf %511 : vector<8x32xf32>
    %513 = math.exp %512 : vector<8x32xf32>
    %cst_181 = arith.constant 1.000000e+00 : f32
    %514 = vector.broadcast %cst_181 : f32 to vector<8x32xf32>
    %515 = arith.addf %514, %513 : vector<8x32xf32>
    %516 = arith.divf %514, %515 : vector<8x32xf32>
    %517 = vector.extract_strided_slice %510 {offsets = [0, 32], sizes = [8, 32], strides = [1, 1]} : vector<8x128xf32> to vector<8x32xf32>
    %518 = arith.negf %517 : vector<8x32xf32>
    %519 = math.exp %518 : vector<8x32xf32>
    %cst_182 = arith.constant 1.000000e+00 : f32
    %520 = vector.broadcast %cst_182 : f32 to vector<8x32xf32>
    %521 = arith.addf %520, %519 : vector<8x32xf32>
    %522 = arith.divf %520, %521 : vector<8x32xf32>
    %523 = vector.extract_strided_slice %510 {offsets = [0, 64], sizes = [8, 32], strides = [1, 1]} : vector<8x128xf32> to vector<8x32xf32>
    %524 = math.tanh %523 : vector<8x32xf32>
    %525 = vector.extract_strided_slice %510 {offsets = [0, 96], sizes = [8, 32], strides = [1, 1]} : vector<8x128xf32> to vector<8x32xf32>
    %526 = arith.negf %525 : vector<8x32xf32>
    %527 = math.exp %526 : vector<8x32xf32>
    %cst_183 = arith.constant 1.000000e+00 : f32
    %528 = vector.broadcast %cst_183 : f32 to vector<8x32xf32>
    %529 = arith.addf %528, %527 : vector<8x32xf32>
    %530 = arith.divf %528, %529 : vector<8x32xf32>
    %531 = arith.mulf %522, %457 : vector<8x32xf32>
    %532 = arith.mulf %516, %524 : vector<8x32xf32>
    %533 = arith.addf %531, %532 : vector<8x32xf32>
    %534 = math.tanh %533 : vector<8x32xf32>
    %535 = arith.mulf %530, %534 : vector<8x32xf32>
    %c0_i32_184 = arith.constant 0 : i32
    %536 = arith.addi %0, %c0_i32_184 : i32
    %c7_i32 = arith.constant 7 : i32
    %537 = arith.addi %536, %c7_i32 : i32
    %538 = arith.index_cast %537 : i32 to index
    %539 = memref.load %arg1[%538] : memref<64xi32, #tpu.memory_space<smem>>
    %540 = arith.index_cast %539 : i32 to index
    %c0_185 = arith.constant 0 : index
    %541 = vector.load %arg2[%540, %c0_185] : memref<20x128xf32, #tpu.memory_space<vmem>>, vector<1x128xf32>
    %c8_i32_186 = arith.constant 8 : i32
    %542 = arith.addi %0, %c8_i32_186 : i32
    %c7_i32_187 = arith.constant 7 : i32
    %543 = arith.addi %542, %c7_i32_187 : i32
    %544 = arith.index_cast %543 : i32 to index
    %545 = memref.load %arg1[%544] : memref<64xi32, #tpu.memory_space<smem>>
    %546 = arith.index_cast %545 : i32 to index
    %c0_188 = arith.constant 0 : index
    %547 = vector.load %arg2[%546, %c0_188] : memref<20x128xf32, #tpu.memory_space<vmem>>, vector<1x128xf32>
    %c16_i32_189 = arith.constant 16 : i32
    %548 = arith.addi %0, %c16_i32_189 : i32
    %c7_i32_190 = arith.constant 7 : i32
    %549 = arith.addi %548, %c7_i32_190 : i32
    %550 = arith.index_cast %549 : i32 to index
    %551 = memref.load %arg1[%550] : memref<64xi32, #tpu.memory_space<smem>>
    %552 = arith.index_cast %551 : i32 to index
    %c0_191 = arith.constant 0 : index
    %553 = vector.load %arg2[%552, %c0_191] : memref<20x128xf32, #tpu.memory_space<vmem>>, vector<1x128xf32>
    %c24_i32_192 = arith.constant 24 : i32
    %554 = arith.addi %0, %c24_i32_192 : i32
    %c7_i32_193 = arith.constant 7 : i32
    %555 = arith.addi %554, %c7_i32_193 : i32
    %556 = arith.index_cast %555 : i32 to index
    %557 = memref.load %arg1[%556] : memref<64xi32, #tpu.memory_space<smem>>
    %558 = arith.index_cast %557 : i32 to index
    %c0_194 = arith.constant 0 : index
    %559 = vector.load %arg2[%558, %c0_194] : memref<20x128xf32, #tpu.memory_space<vmem>>, vector<1x128xf32>
    %c32_i32_195 = arith.constant 32 : i32
    %560 = arith.addi %0, %c32_i32_195 : i32
    %c7_i32_196 = arith.constant 7 : i32
    %561 = arith.addi %560, %c7_i32_196 : i32
    %562 = arith.index_cast %561 : i32 to index
    %563 = memref.load %arg1[%562] : memref<64xi32, #tpu.memory_space<smem>>
    %564 = arith.index_cast %563 : i32 to index
    %c0_197 = arith.constant 0 : index
    %565 = vector.load %arg2[%564, %c0_197] : memref<20x128xf32, #tpu.memory_space<vmem>>, vector<1x128xf32>
    %c40_i32_198 = arith.constant 40 : i32
    %566 = arith.addi %0, %c40_i32_198 : i32
    %c7_i32_199 = arith.constant 7 : i32
    %567 = arith.addi %566, %c7_i32_199 : i32
    %568 = arith.index_cast %567 : i32 to index
    %569 = memref.load %arg1[%568] : memref<64xi32, #tpu.memory_space<smem>>
    %570 = arith.index_cast %569 : i32 to index
    %c0_200 = arith.constant 0 : index
    %571 = vector.load %arg2[%570, %c0_200] : memref<20x128xf32, #tpu.memory_space<vmem>>, vector<1x128xf32>
    %c48_i32_201 = arith.constant 48 : i32
    %572 = arith.addi %0, %c48_i32_201 : i32
    %c7_i32_202 = arith.constant 7 : i32
    %573 = arith.addi %572, %c7_i32_202 : i32
    %574 = arith.index_cast %573 : i32 to index
    %575 = memref.load %arg1[%574] : memref<64xi32, #tpu.memory_space<smem>>
    %576 = arith.index_cast %575 : i32 to index
    %c0_203 = arith.constant 0 : index
    %577 = vector.load %arg2[%576, %c0_203] : memref<20x128xf32, #tpu.memory_space<vmem>>, vector<1x128xf32>
    %c56_i32_204 = arith.constant 56 : i32
    %578 = arith.addi %0, %c56_i32_204 : i32
    %c7_i32_205 = arith.constant 7 : i32
    %579 = arith.addi %578, %c7_i32_205 : i32
    %580 = arith.index_cast %579 : i32 to index
    %581 = memref.load %arg1[%580] : memref<64xi32, #tpu.memory_space<smem>>
    %582 = arith.index_cast %581 : i32 to index
    %c0_206 = arith.constant 0 : index
    %583 = vector.load %arg2[%582, %c0_206] : memref<20x128xf32, #tpu.memory_space<vmem>>, vector<1x128xf32>
    %584 = tpu.concatenate %541, %547, %553, %559, %565, %571, %577, %583 in 0 : vector<1x128xf32>, vector<1x128xf32>, vector<1x128xf32>, vector<1x128xf32>, vector<1x128xf32>, vector<1x128xf32>, vector<1x128xf32>, vector<1x128xf32> -> vector<8x128xf32>
    %cst_207 = arith.constant dense<0.000000e+00> : vector<8x128xf32>
    %585 = tpu.matmul %535, %1, %cst_207 {dimension_numbers = #tpu.dot_dimension_numbers<[1], [0], [0], [1], [0, 0, 1, 1], [], []>} : vector<8x32xf32>, vector<32x128xf32>, vector<8x128xf32> -> vector<8x128xf32>
    %586 = arith.addf %584, %585 : vector<8x128xf32>
    %587 = vector.extract_strided_slice %586 {offsets = [0, 0], sizes = [8, 32], strides = [1, 1]} : vector<8x128xf32> to vector<8x32xf32>
    %588 = arith.negf %587 : vector<8x32xf32>
    %589 = math.exp %588 : vector<8x32xf32>
    %cst_208 = arith.constant 1.000000e+00 : f32
    %590 = vector.broadcast %cst_208 : f32 to vector<8x32xf32>
    %591 = arith.addf %590, %589 : vector<8x32xf32>
    %592 = arith.divf %590, %591 : vector<8x32xf32>
    %593 = vector.extract_strided_slice %586 {offsets = [0, 32], sizes = [8, 32], strides = [1, 1]} : vector<8x128xf32> to vector<8x32xf32>
    %594 = arith.negf %593 : vector<8x32xf32>
    %595 = math.exp %594 : vector<8x32xf32>
    %cst_209 = arith.constant 1.000000e+00 : f32
    %596 = vector.broadcast %cst_209 : f32 to vector<8x32xf32>
    %597 = arith.addf %596, %595 : vector<8x32xf32>
    %598 = arith.divf %596, %597 : vector<8x32xf32>
    %599 = vector.extract_strided_slice %586 {offsets = [0, 64], sizes = [8, 32], strides = [1, 1]} : vector<8x128xf32> to vector<8x32xf32>
    %600 = math.tanh %599 : vector<8x32xf32>
    %601 = vector.extract_strided_slice %586 {offsets = [0, 96], sizes = [8, 32], strides = [1, 1]} : vector<8x128xf32> to vector<8x32xf32>
    %602 = arith.negf %601 : vector<8x32xf32>
    %603 = math.exp %602 : vector<8x32xf32>
    %cst_210 = arith.constant 1.000000e+00 : f32
    %604 = vector.broadcast %cst_210 : f32 to vector<8x32xf32>
    %605 = arith.addf %604, %603 : vector<8x32xf32>
    %606 = arith.divf %604, %605 : vector<8x32xf32>
    %607 = arith.mulf %598, %533 : vector<8x32xf32>
    %608 = arith.mulf %592, %600 : vector<8x32xf32>
    %609 = arith.addf %607, %608 : vector<8x32xf32>
    %610 = math.tanh %609 : vector<8x32xf32>
    %611 = arith.mulf %606, %610 : vector<8x32xf32>
    %612 = tpu.concatenate %79, %155, %231, %307, %383, %459, %535, %611 in 0 : vector<8x32xf32>, vector<8x32xf32>, vector<8x32xf32>, vector<8x32xf32>, vector<8x32xf32>, vector<8x32xf32>, vector<8x32xf32>, vector<8x32xf32> -> vector<64x32xf32>
    %c0_211 = arith.constant 0 : index
    %c0_212 = arith.constant 0 : index
    %613 = vector.load %arg4[%c0_211, %c0_212] : memref<32x128xf32, #tpu.memory_space<vmem>>, vector<32x128xf32>
    %cst_213 = arith.constant dense<0.000000e+00> : vector<64x128xf32>
    %614 = tpu.matmul %612, %613, %cst_213 {dimension_numbers = #tpu.dot_dimension_numbers<[1], [0], [0], [1], [0, 0, 1, 1], [], []>} : vector<64x32xf32>, vector<32x128xf32>, vector<64x128xf32> -> vector<64x128xf32>
    %c0_214 = arith.constant 0 : index
    %c0_215 = arith.constant 0 : index
    %615 = vector.load %arg5[%c0_214, %c0_215] : memref<1x128xf32, #tpu.memory_space<vmem>>, vector<1x128xf32>
    %616 = vector.broadcast %615 : vector<1x128xf32> to vector<64x128xf32>
    %617 = arith.addf %614, %616 : vector<64x128xf32>
    %cst_216 = arith.constant dense<0xFF800000> : vector<64xf32>
    %618 = vector.multi_reduction <maximumf>, %617, %cst_216 [1] : vector<64x128xf32> to vector<64xf32>
    %619 = vector.shape_cast %618 : vector<64xf32> to vector<64x1xf32>
    %620 = vector.broadcast %619 : vector<64x1xf32> to vector<64x128xf32>
    %621 = arith.subf %617, %620 : vector<64x128xf32>
    %622 = math.exp %621 : vector<64x128xf32>
    %cst_217 = arith.constant dense<0.000000e+00> : vector<64xf32>
    %623 = vector.multi_reduction <add>, %622, %cst_217 [1] : vector<64x128xf32> to vector<64xf32>
    %624 = vector.shape_cast %623 : vector<64xf32> to vector<64x1xf32>
    %625 = math.log %624 : vector<64x1xf32>
    %626 = arith.addf %619, %625 : vector<64x1xf32>
    %627 = vector.broadcast %626 : vector<64x1xf32> to vector<64x128xf32>
    %628 = arith.subf %617, %627 : vector<64x128xf32>
    %c0_218 = arith.constant 0 : index
    %c0_219 = arith.constant 0 : index
    %629 = vector.load %arg6[%c0_218, %c0_219] : memref<64x128xf32, #tpu.memory_space<vmem>>, vector<64x128xf32>
    tpu.vector_store %arg6[%c0_218, %c0_219], %628 {strides = array<i32>} : memref<64x128xf32, #tpu.memory_space<vmem>>, vector<64x128xf32>,
    return
  }
  func.func @transform_0(%arg0: i32, %arg1: memref<64xi32, #tpu.memory_space<smem>>) -> (i32, i32) {
    %c0_i32 = arith.constant 0 : i32
    %c0_i32_0 = arith.constant 0 : i32
    %c0_i32_1 = arith.constant 0 : i32
    return %c0_i32, %c0_i32_0 : i32, i32
  }
  func.func @transform_1(%arg0: i32, %arg1: memref<64xi32, #tpu.memory_space<smem>>) -> (i32, i32) {
    %c0_i32 = arith.constant 0 : i32
    %c0_i32_0 = arith.constant 0 : i32
    %c0_i32_1 = arith.constant 0 : i32
    return %c0_i32, %c0_i32_0 : i32, i32
  }
  func.func @transform_2(%arg0: i32, %arg1: memref<64xi32, #tpu.memory_space<smem>>) -> (i32, i32) {
    %c0_i32 = arith.constant 0 : i32
    %c0_i32_0 = arith.constant 0 : i32
    %c0_i32_1 = arith.constant 0 : i32
    return %c0_i32, %c0_i32_0 : i32, i32
  }
  func.func @transform_3(%arg0: i32, %arg1: memref<64xi32, #tpu.memory_space<smem>>) -> (i32, i32) {
    %c0_i32 = arith.constant 0 : i32
    %c0_i32_0 = arith.constant 0 : i32
    %c0_i32_1 = arith.constant 0 : i32
    return %c0_i32, %c0_i32_0 : i32, i32
  }
  func.func @transform_4(%arg0: i32, %arg1: memref<64xi32, #tpu.memory_space<smem>>) -> (i32, i32) {
    %c0_i32 = arith.constant 0 : i32
    %c0_i32_0 = arith.constant 0 : i32
    return %arg0, %c0_i32 : i32, i32
  }
}

</mosaic_0001>

<llo_original>
// kernel: tpu_custom_call.1
$region0: #{tpu_custom_call.1}
  #allocation0 [shape = 'u32[]', space=smem, size = 0x4, offset = 0x4, fixed_abs, tag = 'smem constant byte address 0x4 - core index']
  #allocation1 [shape = 'u32[144,128]{1,0:T(1,128)}', space=vmem, size = 0x12000, scoped, tag = 'internal scratch']
  #allocation2 [shape = 's32[1]{0}', space=sflag, size = 0x4, scoped, tag = 'scoped memory for tpu_custom_call.1']
  #allocation3 [shape = 'u8[512]{0}', space=smem, size = 0x200, scoped, tag = 'prefetched SMEM operand 0']
  %s0 = inlined_call_operand.hbm [shape: s32[64], index: 0, kind: input, shape index: {}]
  %s1 = inlined_call_operand.hbm [shape: f32[20,128], index: 1, kind: input, shape index: {}]
  %s2 = inlined_call_operand.hbm [shape: f32[32,128], index: 2, kind: input, shape index: {}]
  %s3 = inlined_call_operand.hbm [shape: f32[32,128], index: 3, kind: input, shape index: {}]
  %s4 = inlined_call_operand.vmem [shape: f32[1,128], index: 4, kind: input, shape index: {}]
  %s5 = inlined_call_operand.hbm [shape: f32[64,128], index: 5, kind: output, shape index: {}]
  %s6 = sld [smem:[#allocation0]]
  $region38: #{tpu_custom_call.1} parent=0
    _
  %s8 = ssub.s32 1, %s6
  %s9 = scalar_select 0, %s8, %s6
  %11 = dma.hbm_to_smem %s0, 16, [#allocation3], [#allocation2]
  %12 = dma.done [#allocation2], 16
  %13 = sfence
  $region1: #{tpu_custom_call.1} parent=0
    #allocation4 [shape = 'u8[12288]{0}', space=vmem, size = 0x3000, scoped, tag = 'input window, operand 1, single buffered']
    #allocation5 [shape = 's32[1]{0}', space=sflag, size = 0x4, scoped, tag = 'scoped memory for tpu_custom_call.1']
    #allocation6 [shape = 's32[1]{0}', space=sflag, size = 0x4, scoped, tag = 'scoped memory for tpu_custom_call.1']
    #allocation7 [shape = 'u8[16384]{0}', space=vmem, size = 0x4000, scoped, tag = 'input window, operand 2, single buffered']
    #allocation8 [shape = 's32[1]{0}', space=sflag, size = 0x4, scoped, tag = 'scoped memory for tpu_custom_call.1']
    #allocation9 [shape = 'u8[16384]{0}', space=vmem, size = 0x4000, scoped, tag = 'input window, operand 3, single buffered']
    #allocation10 [shape = 'u8[32768]{0}', space=vmem, size = 0x8000, scoped, tag = 'output window, operand 0, single buffered']
    %14 = vsyncpa [#allocation5], 0
    %15 = vsyncpa [#allocation8], 0
    %16 = vsyncpa [#allocation6], 0
    // Predicated region
    $region2: #{tpu_custom_call.1} parent=1 // pred_check
      _
    $region3: #{tpu_custom_call.1} parent=1 // pred_check_branch
      %18 = sbr.rel (0) target = $region5
    $region4: #{tpu_custom_call.1} parent=1 // pred_region
      %s20 = ssub.s32 384, 384
      %21 = vsyncadd [#allocation5], %s20
      %s22 = sshll.u32 [#allocation4], 4
      %s23 = int_to_ptr.vmem [resolvable:$true] %s22
      %28 = dma.hbm_to_vmem [thread:$0]  %s1, 384, %s23, [#allocation5], 128, 128, 8
    $region5: #{tpu_custom_call.1} parent=1 // pred_fallthru
      _
    // Predicated region
    $region6: #{tpu_custom_call.1} parent=1 // pred_check
      _
    $region7: #{tpu_custom_call.1} parent=1 // pred_check_branch
      %30 = sbr.rel (0) target = $region9
    $region8: #{tpu_custom_call.1} parent=1 // pred_region
      %s32 = ssub.s32 512, 512
      %33 = vsyncadd [#allocation8], %s32
      %s34 = sshll.u32 [#allocation7], 4
      %s35 = int_to_ptr.vmem [resolvable:$true] %s34
      %40 = dma.hbm_to_vmem [thread:$0]  %s2, 512, %s35, [#allocation8], 128, 128, 8
    $region9: #{tpu_custom_call.1} parent=1 // pred_fallthru
      _
    // Predicated region
    $region10: #{tpu_custom_call.1} parent=1 // pred_check
      _
    $region11: #{tpu_custom_call.1} parent=1 // pred_check_branch
      %42 = sbr.rel (0) target = $region13
    $region12: #{tpu_custom_call.1} parent=1 // pred_region
      %s44 = ssub.s32 512, 512
      %45 = vsyncadd [#allocation8], %s44
      %s46 = sshll.u32 [#allocation9], 4
      %s47 = int_to_ptr.vmem [resolvable:$true] %s46
      %52 = dma.hbm_to_vmem [thread:$0]  %s3, 512, %s47, [#allocation8], 128, 128, 8
    $region13: #{tpu_custom_call.1} parent=1 // pred_fallthru
      _
    // Predicated region
    $region14: #{tpu_custom_call.1} parent=1 // pred_check
      _
    $region15: #{tpu_custom_call.1} parent=1 // pred_check_branch
      %54 = sbr.rel (0) target = $region17
    $region16: #{tpu_custom_call.1} parent=1 // pred_region
      _
    $region17: #{tpu_custom_call.1} parent=1 // pred_fallthru
      _
    // Predicated region
    $region18: #{tpu_custom_call.1} parent=1 // pred_check
      _
    $region19: #{tpu_custom_call.1} parent=1 // pred_check_branch
      %56 = sbr.rel (0) target = $region21
    $region20: #{tpu_custom_call.1} parent=1 // pred_region
      %57 = dma.done [#allocation5], 384
    $region21: #{tpu_custom_call.1} parent=1 // pred_fallthru
      _
    // Predicated region
    $region22: #{tpu_custom_call.1} parent=1 // pred_check
      _
    $region23: #{tpu_custom_call.1} parent=1 // pred_check_branch
      %59 = sbr.rel (0) target = $region25
    $region24: #{tpu_custom_call.1} parent=1 // pred_region
      %60 = dma.done [#allocation8], 512
    $region25: #{tpu_custom_call.1} parent=1 // pred_fallthru
      _
    // Predicated region
    $region26: #{tpu_custom_call.1} parent=1 // pred_check
      _
    $region27: #{tpu_custom_call.1} parent=1 // pred_check_branch
      %62 = sbr.rel (0) target = $region29
    $region28: #{tpu_custom_call.1} parent=1 // pred_region
      %63 = dma.done [#allocation8], 512
    $region29: #{tpu_custom_call.1} parent=1 // pred_fallthru
      _
    %s64 = smul.u32 0, 64
    %v65 = vld [vmem:[#allocation7] sm:$0xff]
    %v66 = vld [vmem:[#allocation7 + $0x8] sm:$0xff]
    %v67 = vld [vmem:[#allocation7 + $0x10] sm:$0xff]
    %v68 = vld [vmem:[#allocation7 + $0x18] sm:$0xff]
    %s69 = sld [smem:[#allocation3 + %s64]]
    %s70 = scalar_lea.vmem [#allocation4], %s69
    %v71 = vld [vmem:[%s70] sm:$0x1]
    %s72 = sadd.s32 %s64, 8
    %s73 = sld [smem:[#allocation3 + %s72]]
    %s74 = scalar_lea.vmem [#allocation4], %s73
    %v75 = vld [vmem:[%s74] sm:$0x1]
    %s76 = sadd.s32 %s64, 16
    %s77 = sld [smem:[#allocation3 + %s76]]
    %s78 = scalar_lea.vmem [#allocation4], %s77
    %v79 = vld [vmem:[%s78] sm:$0x1]
    %s80 = sadd.s32 %s64, 24
    %s81 = sld [smem:[#allocation3 + %s80]]
    %s82 = scalar_lea.vmem [#allocation4], %s81
    %v83 = vld [vmem:[%s82] sm:$0x1]
    %s84 = sadd.s32 %s64, 32
    %s85 = sld [smem:[#allocation3 + %s84]]
    %s86 = scalar_lea.vmem [#allocation4], %s85
    %v87 = vld [vmem:[%s86] sm:$0x1]
    %s88 = sadd.s32 %s64, 40
    %s89 = sld [smem:[#allocation3 + %s88]]
    %s90 = scalar_lea.vmem [#allocation4], %s89
    %v91 = vld [vmem:[%s90] sm:$0x1]
    %s92 = sadd.s32 %s64, 48
    %s93 = sld [smem:[#allocation3 + %s92]]
    %s94 = scalar_lea.vmem [#allocation4], %s93
    %v95 = vld [vmem:[%s94] sm:$0x1]
    %s96 = sadd.s32 %s64, 56
    %s97 = sld [smem:[#allocation3 + %s96]]
    %s98 = scalar_lea.vmem [#allocation4], %s97
    %v99 = vld [vmem:[%s98] sm:$0x1]
    %v101 = vrot.slane %v75, 7
    %v104 = vrot.slane %v79, 6
    %v107 = vrot.slane %v83, 5
    %v110 = vrot.slane %v87, 4
    %v113 = vrot.slane %v91, 3
    %v116 = vrot.slane %v95, 2
    %v119 = vrot.slane %v99, 1
    %vm121 = vcmask 1040384
    %v122 = vsel %vm121, %v71, %v101
    %vm123 = vcmask 1041408
    %v124 = vsel %vm123, %v122, %v104
    %vm125 = vcmask 1042432
    %v126 = vsel %vm125, %v124, %v107
    %vm127 = vcmask 1043456
    %v128 = vsel %vm127, %v126, %v110
    %vm129 = vcmask 1044480
    %v130 = vsel %vm129, %v128, %v113
    %vm131 = vcmask 1045504
    %v132 = vsel %vm131, %v130, %v116
    %vm133 = vcmask 1046528
    %v134 = vsel %vm133, %v132, %v119
    %vm135 = vcmask 261120
    %v137 = vsel %vm135, 0.0, 0
    %139 = vmatprep.subr.mxu0 0.0
    %140 = vmatpush1.msra.mxu0 %v65
    %141 = vmatprep.subr.mxu0 0.0
    %142 = vmatpush1.msra.mxu0 %v66
    %143 = vmatprep.subr.mxu0 0.0
    %144 = vmatpush1.msra.mxu0 %v67
    %145 = vmatprep.subr.mxu0 0.0
    %146 = vmatpush1.msra.mxu0 %v68
    %147 = vmatprep.subr.mxu0 0.0
    %148 = vmatpush1.msra.mxu0 0.0
    %149 = vmatprep.subr.mxu0 0.0
    %150 = vmatpush1.msra.mxu0 0.0
    %151 = vmatprep.subr.mxu0 0.0
    %152 = vmatpush1.msra.mxu0 0.0
    %153 = vmatprep.subr.mxu0 0.0
    %154 = vmatpush1.msra.mxu0 0.0
    %155 = vmatprep.subr.mxu0 0.0
    %156 = vmatpush1.msra.mxu0 0.0
    %157 = vmatprep.subr.mxu0 0.0
    %158 = vmatpush1.msra.mxu0 0.0
    %159 = vmatprep.subr.mxu0 0.0
    %160 = vmatpush1.msra.mxu0 0.0
    %161 = vmatprep.subr.mxu0 0.0
    %162 = vmatpush1.msra.mxu0 0.0
    %163 = vmatprep.subr.mxu0 0.0
    %164 = vmatpush1.msra.mxu0 0.0
    %165 = vmatprep.subr.mxu0 0.0
    %166 = vmatpush1.msra.mxu0 0.0
    %167 = vmatprep.subr.mxu0 0.0
    %168 = vmatpush1.msra.mxu0 0.0
    %169 = vmatprep.subr.mxu0 0.0
    %170 = vmatpush1.msra.mxu0 0.0
    %171 = vmatprep.subr.mxu0 0.0
    %172 = vmatpush1.msra.mxu0 0.0
    %173 = vmatprep.subr.mxu0 0.0
    %174 = vmatpush1.msra.mxu0 0.0
    %175 = vmatprep.subr.mxu0 0.0
    %176 = vmatpush1.msra.mxu0 0.0
    %177 = vmatprep.subr.mxu0 0.0
    %178 = vmatpush1.msra.mxu0 0.0
    %179 = vmatprep.subr.mxu0 0.0
    %180 = vmatpush1.msra.mxu0 0.0
    %181 = vmatprep.subr.mxu0 0.0
    %182 = vmatpush1.msra.mxu0 0.0
    %183 = vmatprep.subr.mxu0 0.0
    %184 = vmatpush1.msra.mxu0 0.0
    %185 = vmatprep.subr.mxu0 0.0
    %186 = vmatpush1.msra.mxu0 0.0
    %187 = vmatprep.subr.mxu0 0.0
    %188 = vmatpush1.msra.mxu0 0.0
    %189 = vmatprep.subr.mxu0 0.0
    %190 = vmatpush1.msra.mxu0 0.0
    %191 = vmatprep.subr.mxu0 0.0
    %192 = vmatpush1.msra.mxu0 0.0
    %193 = vmatprep.subr.mxu0 0.0
    %194 = vmatpush1.msra.mxu0 0.0
    %195 = vmatprep.subr.mxu0 0.0
    %196 = vmatpush1.msra.mxu0 0.0
    %197 = vmatprep.subr.mxu0 0.0
    %198 = vmatpush1.msra.mxu0 0.0
    %199 = vmatprep.subr.mxu0 0.0
    %200 = vmatpush1.msra.mxu0 0.0
    %201 = vmatprep.subr.mxu0 0.0
    %202 = vmatpush1.msra.mxu0 0.0
    %203 = vmatprep.mubr.f32.mxu0 0.0
    %204 = vmatmul.mubr.f32.gmra.mrb[0].mxu0 %v137
    %v205 = vpop.f32.mrb[0].mxu0
    %v206 = vadd.f32 0.0, %v205
    %v207 = vpop.f32.mrb[0].mxu0
    %208 = vdwg.mxu0
    %v209 = vadd.f32 %v134, %v206
    %v210 = vxor.u32 %v209, 2147483648
    %v211 = vmul.f32 %v210, 1.442695
    %v212 = vpow.pop %v211
    %v213 = vadd.f32 %v212, 1.0
    %v214 = vrcp.pop %v213
    %v215 = vmul.f32 1.0, %v214
    %v216 = vtanh.pop %v209
    %v217 = vmul.f32 %v215, 0.0
    %219 = vrot.lane.b32.xlu0 %v216, 64
    %v220 = vpop.permute.xlu0 %219
    %v222 = vmul.f32 %v215, %v220
    %224 = vrot.lane.b32.xlu0 %v222, 32
    %v225 = vpop.permute.xlu0 %224
    %v227 = vadd.f32 %v217, %v225
    %v228 = vtanh.pop %v227
    %230 = vrot.lane.b32.xlu0 %v228, 64
    %v231 = vpop.permute.xlu0 %230
    %v233 = vmul.f32 %v215, %v231
    %s234 = sadd.s32 %s64, 1
    %s235 = sld [smem:[#allocation3 + %s234]]
    %s236 = scalar_lea.vmem [#allocation4], %s235
    %v237 = vld [vmem:[%s236] sm:$0x1]
    %s238 = sadd.s32 %s64, 9
    %s239 = sld [smem:[#allocation3 + %s238]]
    %s240 = scalar_lea.vmem [#allocation4], %s239
    %v241 = vld [vmem:[%s240] sm:$0x1]
    %s242 = sadd.s32 %s64, 17
    %s243 = sld [smem:[#allocation3 + %s242]]
    %s244 = scalar_lea.vmem [#allocation4], %s243
    %v245 = vld [vmem:[%s244] sm:$0x1]
    %s246 = sadd.s32 %s64, 25
    %s247 = sld [smem:[#allocation3 + %s246]]
    %s248 = scalar_lea.vmem [#allocation4], %s247
    %v249 = vld [vmem:[%s248] sm:$0x1]
    %s250 = sadd.s32 %s64, 33
    %s251 = sld [smem:[#allocation3 + %s250]]
    %s252 = scalar_lea.vmem [#allocation4], %s251
    %v253 = vld [vmem:[%s252] sm:$0x1]
    %s254 = sadd.s32 %s64, 41
    %s255 = sld [smem:[#allocation3 + %s254]]
    %s256 = scalar_lea.vmem [#allocation4], %s255
    %v257 = vld [vmem:[%s256] sm:$0x1]
    %s258 = sadd.s32 %s64, 49
    %s259 = sld [smem:[#allocation3 + %s258]]
    %s260 = scalar_lea.vmem [#allocation4], %s259
    %v261 = vld [vmem:[%s260] sm:$0x1]
    %s262 = sadd.s32 %s64, 57
    %s263 = sld [smem:[#allocation3 + %s262]]
    %s264 = scalar_lea.vmem [#allocation4], %s263
    %v265 = vld [vmem:[%s264] sm:$0x1]
    %v267 = vrot.slane %v241, 7
    %v270 = vrot.slane %v245, 6
    %v273 = vrot.slane %v249, 5
    %v276 = vrot.slane %v253, 4
    %v279 = vrot.slane %v257, 3
    %v282 = vrot.slane %v261, 2
    %v285 = vrot.slane %v265, 1
    %v287 = vsel %vm121, %v237, %v267
    %v288 = vsel %vm123, %v287, %v270
    %v289 = vsel %vm125, %v288, %v273
    %v290 = vsel %vm127, %v289, %v276
    %v291 = vsel %vm129, %v290, %v279
    %v292 = vsel %vm131, %v291, %v282
    %v293 = vsel %vm133, %v292, %v285
    %295 = vrot.lane.b32.xlu0 %v233, 32
    %v296 = vpop.permute.xlu0 %295
    %v297 = vsel %vm135, %v296, 0
    %299 = vmatprep.subr.mxu0 0.0
    %300 = vmatpush1.msra.mxu0 %v65
    %301 = vmatprep.subr.mxu0 0.0
    %302 = vmatpush1.msra.mxu0 %v66
    %303 = vmatprep.subr.mxu0 0.0
    %304 = vmatpush1.msra.mxu0 %v67
    %305 = vmatprep.subr.mxu0 0.0
    %306 = vmatpush1.msra.mxu0 %v68
    %307 = vmatprep.subr.mxu0 0.0
    %308 = vmatpush1.msra.mxu0 0.0
    %309 = vmatprep.subr.mxu0 0.0
    %310 = vmatpush1.msra.mxu0 0.0
    %311 = vmatprep.subr.mxu0 0.0
    %312 = vmatpush1.msra.mxu0 0.0
    %313 = vmatprep.subr.mxu0 0.0
    %314 = vmatpush1.msra.mxu0 0.0
    %315 = vmatprep.subr.mxu0 0.0
    %316 = vmatpush1.msra.mxu0 0.0
    %317 = vmatprep.subr.mxu0 0.0
    %318 = vmatpush1.msra.mxu0 0.0
    %319 = vmatprep.subr.mxu0 0.0
    %320 = vmatpush1.msra.mxu0 0.0
    %321 = vmatprep.subr.mxu0 0.0
    %322 = vmatpush1.msra.mxu0 0.0
    %323 = vmatprep.subr.mxu0 0.0
    %324 = vmatpush1.msra.mxu0 0.0
    %325 = vmatprep.subr.mxu0 0.0
    %326 = vmatpush1.msra.mxu0 0.0
    %327 = vmatprep.subr.mxu0 0.0
    %328 = vmatpush1.msra.mxu0 0.0
    %329 = vmatprep.subr.mxu0 0.0
    %330 = vmatpush1.msra.mxu0 0.0
    %331 = vmatprep.subr.mxu0 0.0
    %332 = vmatpush1.msra.mxu0 0.0
    %333 = vmatprep.subr.mxu0 0.0
    %334 = vmatpush1.msra.mxu0 0.0
    %335 = vmatprep.subr.mxu0 0.0
    %336 = vmatpush1.msra.mxu0 0.0
    %337 = vmatprep.subr.mxu0 0.0
    %338 = vmatpush1.msra.mxu0 0.0
    %339 = vmatprep.subr.mxu0 0.0
    %340 = vmatpush1.msra.mxu0 0.0
    %341 = vmatprep.subr.mxu0 0.0
    %342 = vmatpush1.msra.mxu0 0.0
    %343 = vmatprep.subr.mxu0 0.0
    %344 = vmatpush1.msra.mxu0 0.0
    %345 = vmatprep.subr.mxu0 0.0
    %346 = vmatpush1.msra.mxu0 0.0
    %347 = vmatprep.subr.mxu0 0.0
    %348 = vmatpush1.msra.mxu0 0.0
    %349 = vmatprep.subr.mxu0 0.0
    %350 = vmatpush1.msra.mxu0 0.0
    %351 = vmatprep.subr.mxu0 0.0
    %352 = vmatpush1.msra.mxu0 0.0
    %353 = vmatprep.subr.mxu0 0.0
    %354 = vmatpush1.msra.mxu0 0.0
    %355 = vmatprep.subr.mxu0 0.0
    %356 = vmatpush1.msra.mxu0 0.0
    %357 = vmatprep.subr.mxu0 0.0
    %358 = vmatpush1.msra.mxu0 0.0
    %359 = vmatprep.subr.mxu0 0.0
    %360 = vmatpush1.msra.mxu0 0.0
    %361 = vmatprep.subr.mxu0 0.0
    %362 = vmatpush1.msra.mxu0 0.0
    %363 = vmatprep.mubr.f32.mxu0 0.0
    %364 = vmatmul.mubr.f32.gmra.mrb[0].mxu0 %v297
    %v365 = vpop.f32.mrb[0].mxu0
    %v366 = vadd.f32 0.0, %v365
    %v367 = vpop.f32.mrb[0].mxu0
    %368 = vdwg.mxu0
    %v369 = vadd.f32 %v293, %v366
    %v370 = vxor.u32 %v369, 2147483648
    %v371 = vmul.f32 %v370, 1.442695
    %v372 = vpow.pop %v371
    %v373 = vadd.f32 %v372, 1.0
    %v374 = vrcp.pop %v373
    %v375 = vmul.f32 1.0, %v374
    %v376 = vtanh.pop %v369
    %v377 = vmul.f32 %v375, %v227
    %379 = vrot.lane.b32.xlu0 %v376, 64
    %v380 = vpop.permute.xlu0 %379
    %v382 = vmul.f32 %v375, %v380
    %384 = vrot.lane.b32.xlu0 %v382, 32
    %v385 = vpop.permute.xlu0 %384
    %v387 = vadd.f32 %v377, %v385
    %v388 = vtanh.pop %v387
    %390 = vrot.lane.b32.xlu0 %v388, 64
    %v391 = vpop.permute.xlu0 %390
    %v393 = vmul.f32 %v375, %v391
    %s394 = sadd.s32 %s64, 2
    %s395 = sld [smem:[#allocation3 + %s394]]
    %s396 = scalar_lea.vmem [#allocation4], %s395
    %v397 = vld [vmem:[%s396] sm:$0x1]
    %s398 = sadd.s32 %s64, 10
    %s399 = sld [smem:[#allocation3 + %s398]]
    %s400 = scalar_lea.vmem [#allocation4], %s399
    %v401 = vld [vmem:[%s400] sm:$0x1]
    %s402 = sadd.s32 %s64, 18
    %s403 = sld [smem:[#allocation3 + %s402]]
    %s404 = scalar_lea.vmem [#allocation4], %s403
    %v405 = vld [vmem:[%s404] sm:$0x1]
    %s406 = sadd.s32 %s64, 26
    %s407 = sld [smem:[#allocation3 + %s406]]
    %s408 = scalar_lea.vmem [#allocation4], %s407
    %v409 = vld [vmem:[%s408] sm:$0x1]
    %s410 = sadd.s32 %s64, 34
    %s411 = sld [smem:[#allocation3 + %s410]]
    %s412 = scalar_lea.vmem [#allocation4], %s411
    %v413 = vld [vmem:[%s412] sm:$0x1]
    %s414 = sadd.s32 %s64, 42
    %s415 = sld [smem:[#allocation3 + %s414]]
    %s416 = scalar_lea.vmem [#allocation4], %s415
    %v417 = vld [vmem:[%s416] sm:$0x1]
    %s418 = sadd.s32 %s64, 50
    %s419 = sld [smem:[#allocation3 + %s418]]
    %s420 = scalar_lea.vmem [#allocation4], %s419
    %v421 = vld [vmem:[%s420] sm:$0x1]
    %s422 = sadd.s32 %s64, 58
    %s423 = sld [smem:[#allocation3 + %s422]]
    %s424 = scalar_lea.vmem [#allocation4], %s423
    %v425 = vld [vmem:[%s424] sm:$0x1]
    %v427 = vrot.slane %v401, 7
    %v430 = vrot.slane %v405, 6
    %v433 = vrot.slane %v409, 5
    %v436 = vrot.slane %v413, 4
    %v439 = vrot.slane %v417, 3
    %v442 = vrot.slane %v421, 2
    %v445 = vrot.slane %v425, 1
    %v447 = vsel %vm121, %v397, %v427
    %v448 = vsel %vm123, %v447, %v430
    %v449 = vsel %vm125, %v448, %v433
    %v450 = vsel %vm127, %v449, %v436
    %v451 = vsel %vm129, %v450, %v439
    %v452 = vsel %vm131, %v451, %v442
    %v453 = vsel %vm133, %v452, %v445
    %455 = vrot.lane.b32.xlu0 %v393, 32
    %v456 = vpop.permute.xlu0 %455
    %v457 = vsel %vm135, %v456, 0
    %459 = vmatprep.subr.mxu0 0.0
    %460 = vmatpush1.msra.mxu0 %v65
    %461 = vmatprep.subr.mxu0 0.0
    %462 = vmatpush1.msra.mxu0 %v66
    %463 = vmatprep.subr.mxu0 0.0
    %464 = vmatpush1.msra.mxu0 %v67
    %465 = vmatprep.subr.mxu0 0.0
    %466 = vmatpush1.msra.mxu0 %v68
    %467 = vmatprep.subr.mxu0 0.0
    %468 = vmatpush1.msra.mxu0 0.0
    %469 = vmatprep.subr.mxu0 0.0
    %470 = vmatpush1.msra.mxu0 0.0
    %471 = vmatprep.subr.mxu0 0.0
    %472 = vmatpush1.msra.mxu0 0.0
    %473 = vmatprep.subr.mxu0 0.0
    %474 = vmatpush1.msra.mxu0 0.0
    %475 = vmatprep.subr.mxu0 0.0
    %476 = vmatpush1.msra.mxu0 0.0
    %477 = vmatprep.subr.mxu0 0.0
    %478 = vmatpush1.msra.mxu0 0.0
    %479 = vmatprep.subr.mxu0 0.0
    %480 = vmatpush1.msra.mxu0 0.0
    %481 = vmatprep.subr.mxu0 0.0
    %482 = vmatpush1.msra.mxu0 0.0
    %483 = vmatprep.subr.mxu0 0.0
    %484 = vmatpush1.msra.mxu0 0.0
    %485 = vmatprep.subr.mxu0 0.0
    %486 = vmatpush1.msra.mxu0 0.0
    %487 = vmatprep.subr.mxu0 0.0
    %488 = vmatpush1.msra.mxu0 0.0
    %489 = vmatprep.subr.mxu0 0.0
    %490 = vmatpush1.msra.mxu0 0.0
    %491 = vmatprep.subr.mxu0 0.0
    %492 = vmatpush1.msra.mxu0 0.0
    %493 = vmatprep.subr.mxu0 0.0
    %494 = vmatpush1.msra.mxu0 0.0
    %495 = vmatprep.subr.mxu0 0.0
    %496 = vmatpush1.msra.mxu0 0.0
    %497 = vmatprep.subr.mxu0 0.0
    %498 = vmatpush1.msra.mxu0 0.0
    %499 = vmatprep.subr.mxu0 0.0
    %500 = vmatpush1.msra.mxu0 0.0
    %501 = vmatprep.subr.mxu0 0.0
    %502 = vmatpush1.msra.mxu0 0.0
    %503 = vmatprep.subr.mxu0 0.0
    %504 = vmatpush1.msra.mxu0 0.0
    %505 = vmatprep.subr.mxu0 0.0
    %506 = vmatpush1.msra.mxu0 0.0
    %507 = vmatprep.subr.mxu0 0.0
    %508 = vmatpush1.msra.mxu0 0.0
    %509 = vmatprep.subr.mxu0 0.0
    %510 = vmatpush1.msra.mxu0 0.0
    %511 = vmatprep.subr.mxu0 0.0
    %512 = vmatpush1.msra.mxu0 0.0
    %513 = vmatprep.subr.mxu0 0.0
    %514 = vmatpush1.msra.mxu0 0.0
    %515 = vmatprep.subr.mxu0 0.0
    %516 = vmatpush1.msra.mxu0 0.0
    %517 = vmatprep.subr.mxu0 0.0
    %518 = vmatpush1.msra.mxu0 0.0
    %519 = vmatprep.subr.mxu0 0.0
    %520 = vmatpush1.msra.mxu0 0.0
    %521 = vmatprep.subr.mxu0 0.0
    %522 = vmatpush1.msra.mxu0 0.0
    %523 = vmatprep.mubr.f32.mxu0 0.0
    %524 = vmatmul.mubr.f32.gmra.mrb[0].mxu0 %v457
    %v525 = vpop.f32.mrb[0].mxu0
    %v526 = vadd.f32 0.0, %v525
    %v527 = vpop.f32.mrb[0].mxu0
    %528 = vdwg.mxu0
    %v529 = vadd.f32 %v453, %v526
    %v530 = vxor.u32 %v529, 2147483648
    %v531 = vmul.f32 %v530, 1.442695
    %v532 = vpow.pop %v531
    %v533 = vadd.f32 %v532, 1.0
    %v534 = vrcp.pop %v533
    %v535 = vmul.f32 1.0, %v534
    %v536 = vtanh.pop %v529
    %v537 = vmul.f32 %v535, %v387
    %539 = vrot.lane.b32.xlu0 %v536, 64
    %v540 = vpop.permute.xlu0 %539
    %v542 = vmul.f32 %v535, %v540
    %544 = vrot.lane.b32.xlu0 %v542, 32
    %v545 = vpop.permute.xlu0 %544
    %v547 = vadd.f32 %v537, %v545
    %v548 = vtanh.pop %v547
    %550 = vrot.lane.b32.xlu0 %v548, 64
    %v551 = vpop.permute.xlu0 %550
    %v553 = vmul.f32 %v535, %v551
    %s554 = sadd.s32 %s64, 3
    %s555 = sld [smem:[#allocation3 + %s554]]
    %s556 = scalar_lea.vmem [#allocation4], %s555
    %v557 = vld [vmem:[%s556] sm:$0x1]
    %s558 = sadd.s32 %s64, 11
    %s559 = sld [smem:[#allocation3 + %s558]]
    %s560 = scalar_lea.vmem [#allocation4], %s559
    %v561 = vld [vmem:[%s560] sm:$0x1]
    %s562 = sadd.s32 %s64, 19
    %s563 = sld [smem:[#allocation3 + %s562]]
    %s564 = scalar_lea.vmem [#allocation4], %s563
    %v565 = vld [vmem:[%s564] sm:$0x1]
    %s566 = sadd.s32 %s64, 27
    %s567 = sld [smem:[#allocation3 + %s566]]
    %s568 = scalar_lea.vmem [#allocation4], %s567
    %v569 = vld [vmem:[%s568] sm:$0x1]
    %s570 = sadd.s32 %s64, 35
    %s571 = sld [smem:[#allocation3 + %s570]]
    %s572 = scalar_lea.vmem [#allocation4], %s571
    %v573 = vld [vmem:[%s572] sm:$0x1]
    %s574 = sadd.s32 %s64, 43
    %s575 = sld [smem:[#allocation3 + %s574]]
    %s576 = scalar_lea.vmem [#allocation4], %s575
    %v577 = vld [vmem:[%s576] sm:$0x1]
    %s578 = sadd.s32 %s64, 51
    %s579 = sld [smem:[#allocation3 + %s578]]
    %s580 = scalar_lea.vmem [#allocation4], %s579
    %v581 = vld [vmem:[%s580] sm:$0x1]
    %s582 = sadd.s32 %s64, 59
    %s583 = sld [smem:[#allocation3 + %s582]]
    %s584 = scalar_lea.vmem [#allocation4], %s583
    %v585 = vld [vmem:[%s584] sm:$0x1]
    %v587 = vrot.slane %v561, 7
    %v590 = vrot.slane %v565, 6
    %v593 = vrot.slane %v569, 5
    %v596 = vrot.slane %v573, 4
    %v599 = vrot.slane %v577, 3
    %v602 = vrot.slane %v581, 2
    %v605 = vrot.slane %v585, 1
    %v607 = vsel %vm121, %v557, %v587
    %v608 = vsel %vm123, %v607, %v590
    %v609 = vsel %vm125, %v608, %v593
    %v610 = vsel %vm127, %v609, %v596
    %v611 = vsel %vm129, %v610, %v599
    %v612 = vsel %vm131, %v611, %v602
    %v613 = vsel %vm133, %v612, %v605
    %615 = vrot.lane.b32.xlu0 %v553, 32
    %v616 = vpop.permute.xlu0 %615
    %v617 = vsel %vm135, %v616, 0
    %619 = vmatprep.subr.mxu0 0.0
    %620 = vmatpush1.msra.mxu0 %v65
    %621 = vmatprep.subr.mxu0 0.0
    %622 = vmatpush1.msra.mxu0 %v66
    %623 = vmatprep.subr.mxu0 0.0
    %624 = vmatpush1.msra.mxu0 %v67
    %625 = vmatprep.subr.mxu0 0.0
    %626 = vmatpush1.msra.mxu0 %v68
    %627 = vmatprep.subr.mxu0 0.0
    %628 = vmatpush1.msra.mxu0 0.0
    %629 = vmatprep.subr.mxu0 0.0
    %630 = vmatpush1.msra.mxu0 0.0
    %631 = vmatprep.subr.mxu0 0.0
    %632 = vmatpush1.msra.mxu0 0.0
    %633 = vmatprep.subr.mxu0 0.0
    %634 = vmatpush1.msra.mxu0 0.0
    %635 = vmatprep.subr.mxu0 0.0
    %636 = vmatpush1.msra.mxu0 0.0
    %637 = vmatprep.subr.mxu0 0.0
    %638 = vmatpush1.msra.mxu0 0.0
    %639 = vmatprep.subr.mxu0 0.0
    %640 = vmatpush1.msra.mxu0 0.0
    %641 = vmatprep.subr.mxu0 0.0
    %642 = vmatpush1.msra.mxu0 0.0
    %643 = vmatprep.subr.mxu0 0.0
    %644 = vmatpush1.msra.mxu0 0.0
    %645 = vmatprep.subr.mxu0 0.0
    %646 = vmatpush1.msra.mxu0 0.0
    %647 = vmatprep.subr.mxu0 0.0
    %648 = vmatpush1.msra.mxu0 0.0
    %649 = vmatprep.subr.mxu0 0.0
    %650 = vmatpush1.msra.mxu0 0.0
    %651 = vmatprep.subr.mxu0 0.0
    %652 = vmatpush1.msra.mxu0 0.0
    %653 = vmatprep.subr.mxu0 0.0
    %654 = vmatpush1.msra.mxu0 0.0
    %655 = vmatprep.subr.mxu0 0.0
    %656 = vmatpush1.msra.mxu0 0.0
    %657 = vmatprep.subr.mxu0 0.0
    %658 = vmatpush1.msra.mxu0 0.0
    %659 = vmatprep.subr.mxu0 0.0
    %660 = vmatpush1.msra.mxu0 0.0
    %661 = vmatprep.subr.mxu0 0.0
    %662 = vmatpush1.msra.mxu0 0.0
    %663 = vmatprep.subr.mxu0 0.0
    %664 = vmatpush1.msra.mxu0 0.0
    %665 = vmatprep.subr.mxu0 0.0
    %666 = vmatpush1.msra.mxu0 0.0
    %667 = vmatprep.subr.mxu0 0.0
    %668 = vmatpush1.msra.mxu0 0.0
    %669 = vmatprep.subr.mxu0 0.0
    %670 = vmatpush1.msra.mxu0 0.0
    %671 = vmatprep.subr.mxu0 0.0
    %672 = vmatpush1.msra.mxu0 0.0
    %673 = vmatprep.subr.mxu0 0.0
    %674 = vmatpush1.msra.mxu0 0.0
    %675 = vmatprep.subr.mxu0 0.0
    %676 = vmatpush1.msra.mxu0 0.0
    %677 = vmatprep.subr.mxu0 0.0
    %678 = vmatpush1.msra.mxu0 0.0
    %679 = vmatprep.subr.mxu0 0.0
    %680 = vmatpush1.msra.mxu0 0.0
    %681 = vmatprep.subr.mxu0 0.0
    %682 = vmatpush1.msra.mxu0 0.0
    %683 = vmatprep.mubr.f32.mxu0 0.0
    %684 = vmatmul.mubr.f32.gmra.mrb[0].mxu0 %v617
    %v685 = vpop.f32.mrb[0].mxu0
    %v686 = vadd.f32 0.0, %v685
    %v687 = vpop.f32.mrb[0].mxu0
    %688 = vdwg.mxu0
    %v689 = vadd.f32 %v613, %v686
    %v690 = vxor.u32 %v689, 2147483648
    %v691 = vmul.f32 %v690, 1.442695
    %v692 = vpow.pop %v691
    %v693 = vadd.f32 %v692, 1.0
    %v694 = vrcp.pop %v693
    %v695 = vmul.f32 1.0, %v694
    %v696 = vtanh.pop %v689
    %v697 = vmul.f32 %v695, %v547
    %699 = vrot.lane.b32.xlu0 %v696, 64
    %v700 = vpop.permute.xlu0 %699
    %v702 = vmul.f32 %v695, %v700
    %704 = vrot.lane.b32.xlu0 %v702, 32
    %v705 = vpop.permute.xlu0 %704
    %v707 = vadd.f32 %v697, %v705
    %v708 = vtanh.pop %v707
    %710 = vrot.lane.b32.xlu0 %v708, 64
    %v711 = vpop.permute.xlu0 %710
    %v713 = vmul.f32 %v695, %v711
    %s714 = sadd.s32 %s64, 4
    %s715 = sld [smem:[#allocation3 + %s714]]
    %s716 = scalar_lea.vmem [#allocation4], %s715
    %v717 = vld [vmem:[%s716] sm:$0x1]
    %s718 = sadd.s32 %s64, 12
    %s719 = sld [smem:[#allocation3 + %s718]]
    %s720 = scalar_lea.vmem [#allocation4], %s719
    %v721 = vld [vmem:[%s720] sm:$0x1]
    %s722 = sadd.s32 %s64, 20
    %s723 = sld [smem:[#allocation3 + %s722]]
    %s724 = scalar_lea.vmem [#allocation4], %s723
    %v725 = vld [vmem:[%s724] sm:$0x1]
    %s726 = sadd.s32 %s64, 28
    %s727 = sld [smem:[#allocation3 + %s726]]
    %s728 = scalar_lea.vmem [#allocation4], %s727
    %v729 = vld [vmem:[%s728] sm:$0x1]
    %s730 = sadd.s32 %s64, 36
    %s731 = sld [smem:[#allocation3 + %s730]]
    %s732 = scalar_lea.vmem [#allocation4], %s731
    %v733 = vld [vmem:[%s732] sm:$0x1]
    %s734 = sadd.s32 %s64, 44
    %s735 = sld [smem:[#allocation3 + %s734]]
    %s736 = scalar_lea.vmem [#allocation4], %s735
    %v737 = vld [vmem:[%s736] sm:$0x1]
    %s738 = sadd.s32 %s64, 52
    %s739 = sld [smem:[#allocation3 + %s738]]
    %s740 = scalar_lea.vmem [#allocation4], %s739
    %v741 = vld [vmem:[%s740] sm:$0x1]
    %s742 = sadd.s32 %s64, 60
    %s743 = sld [smem:[#allocation3 + %s742]]
    %s744 = scalar_lea.vmem [#allocation4], %s743
    %v745 = vld [vmem:[%s744] sm:$0x1]
    %v747 = vrot.slane %v721, 7
    %v750 = vrot.slane %v725, 6
    %v753 = vrot.slane %v729, 5
    %v756 = vrot.slane %v733, 4
    %v759 = vrot.slane %v737, 3
    %v762 = vrot.slane %v741, 2
    %v765 = vrot.slane %v745, 1
    %v767 = vsel %vm121, %v717, %v747
    %v768 = vsel %vm123, %v767, %v750
    %v769 = vsel %vm125, %v768, %v753
    %v770 = vsel %vm127, %v769, %v756
    %v771 = vsel %vm129, %v770, %v759
    %v772 = vsel %vm131, %v771, %v762
    %v773 = vsel %vm133, %v772, %v765
    %775 = vrot.lane.b32.xlu0 %v713, 32
    %v776 = vpop.permute.xlu0 %775
    %v777 = vsel %vm135, %v776, 0
    %779 = vmatprep.subr.mxu0 0.0
    %780 = vmatpush1.msra.mxu0 %v65
    %781 = vmatprep.subr.mxu0 0.0
    %782 = vmatpush1.msra.mxu0 %v66
    %783 = vmatprep.subr.mxu0 0.0
    %784 = vmatpush1.msra.mxu0 %v67
    %785 = vmatprep.subr.mxu0 0.0
    %786 = vmatpush1.msra.mxu0 %v68
    %787 = vmatprep.subr.mxu0 0.0
    %788 = vmatpush1.msra.mxu0 0.0
    %789 = vmatprep.subr.mxu0 0.0
    %790 = vmatpush1.msra.mxu0 0.0
    %791 = vmatprep.subr.mxu0 0.0
    %792 = vmatpush1.msra.mxu0 0.0
    %793 = vmatprep.subr.mxu0 0.0
    %794 = vmatpush1.msra.mxu0 0.0
    %795 = vmatprep.subr.mxu0 0.0
    %796 = vmatpush1.msra.mxu0 0.0
    %797 = vmatprep.subr.mxu0 0.0
    %798 = vmatpush1.msra.mxu0 0.0
    %799 = vmatprep.subr.mxu0 0.0
    %800 = vmatpush1.msra.mxu0 0.0
    %801 = vmatprep.subr.mxu0 0.0
    %802 = vmatpush1.msra.mxu0 0.0
    %803 = vmatprep.subr.mxu0 0.0
    %804 = vmatpush1.msra.mxu0 0.0
    %805 = vmatprep.subr.mxu0 0.0
    %806 = vmatpush1.msra.mxu0 0.0
    %807 = vmatprep.subr.mxu0 0.0
    %808 = vmatpush1.msra.mxu0 0.0
    %809 = vmatprep.subr.mxu0 0.0
    %810 = vmatpush1.msra.mxu0 0.0
    %811 = vmatprep.subr.mxu0 0.0
    %812 = vmatpush1.msra.mxu0 0.0
    %813 = vmatprep.subr.mxu0 0.0
    %814 = vmatpush1.msra.mxu0 0.0
    %815 = vmatprep.subr.mxu0 0.0
    %816 = vmatpush1.msra.mxu0 0.0
    %817 = vmatprep.subr.mxu0 0.0
    %818 = vmatpush1.msra.mxu0 0.0
    %819 = vmatprep.subr.mxu0 0.0
    %820 = vmatpush1.msra.mxu0 0.0
    %821 = vmatprep.subr.mxu0 0.0
    %822 = vmatpush1.msra.mxu0 0.0
    %823 = vmatprep.subr.mxu0 0.0
    %824 = vmatpush1.msra.mxu0 0.0
    %825 = vmatprep.subr.mxu0 0.0
    %826 = vmatpush1.msra.mxu0 0.0
    %827 = vmatprep.subr.mxu0 0.0
    %828 = vmatpush1.msra.mxu0 0.0
    %829 = vmatprep.subr.mxu0 0.0
    %830 = vmatpush1.msra.mxu0 0.0
    %831 = vmatprep.subr.mxu0 0.0
    %832 = vmatpush1.msra.mxu0 0.0
    %833 = vmatprep.subr.mxu0 0.0
    %834 = vmatpush1.msra.mxu0 0.0
    %835 = vmatprep.subr.mxu0 0.0
    %836 = vmatpush1.msra.mxu0 0.0
    %837 = vmatprep.subr.mxu0 0.0
    %838 = vmatpush1.msra.mxu0 0.0
    %839 = vmatprep.subr.mxu0 0.0
    %840 = vmatpush1.msra.mxu0 0.0
    %841 = vmatprep.subr.mxu0 0.0
    %842 = vmatpush1.msra.mxu0 0.0
    %843 = vmatprep.mubr.f32.mxu0 0.0
    %844 = vmatmul.mubr.f32.gmra.mrb[0].mxu0 %v777
    %v845 = vpop.f32.mrb[0].mxu0
    %v846 = vadd.f32 0.0, %v845
    %v847 = vpop.f32.mrb[0].mxu0
    %848 = vdwg.mxu0
    %v849 = vadd.f32 %v773, %v846
    %v850 = vxor.u32 %v849, 2147483648
    %v851 = vmul.f32 %v850, 1.442695
    %v852 = vpow.pop %v851
    %v853 = vadd.f32 %v852, 1.0
    %v854 = vrcp.pop %v853
    %v855 = vmul.f32 1.0, %v854
    %v856 = vtanh.pop %v849
    %v857 = vmul.f32 %v855, %v707
    %859 = vrot.lane.b32.xlu0 %v856, 64
    %v860 = vpop.permute.xlu0 %859
    %v862 = vmul.f32 %v855, %v860
    %864 = vrot.lane.b32.xlu0 %v862, 32
    %v865 = vpop.permute.xlu0 %864
    %v867 = vadd.f32 %v857, %v865
    %v868 = vtanh.pop %v867
    %870 = vrot.lane.b32.xlu0 %v868, 64
    %v871 = vpop.permute.xlu0 %870
    %v873 = vmul.f32 %v855, %v871
    %s874 = sadd.s32 %s64, 5
    %s875 = sld [smem:[#allocation3 + %s874]]
    %s876 = scalar_lea.vmem [#allocation4], %s875
    %v877 = vld [vmem:[%s876] sm:$0x1]
    %s878 = sadd.s32 %s64, 13
    %s879 = sld [smem:[#allocation3 + %s878]]
    %s880 = scalar_lea.vmem [#allocation4], %s879
    %v881 = vld [vmem:[%s880] sm:$0x1]
    %s882 = sadd.s32 %s64, 21
    %s883 = sld [smem:[#allocation3 + %s882]]
    %s884 = scalar_lea.vmem [#allocation4], %s883
    %v885 = vld [vmem:[%s884] sm:$0x1]
    %s886 = sadd.s32 %s64, 29
    %s887 = sld [smem:[#allocation3 + %s886]]
    %s888 = scalar_lea.vmem [#allocation4], %s887
    %v889 = vld [vmem:[%s888] sm:$0x1]
    %s890 = sadd.s32 %s64, 37
    %s891 = sld [smem:[#allocation3 + %s890]]
    %s892 = scalar_lea.vmem [#allocation4], %s891
    %v893 = vld [vmem:[%s892] sm:$0x1]
    %s894 = sadd.s32 %s64, 45
    %s895 = sld [smem:[#allocation3 + %s894]]
    %s896 = scalar_lea.vmem [#allocation4], %s895
    %v897 = vld [vmem:[%s896] sm:$0x1]
    %s898 = sadd.s32 %s64, 53
    %s899 = sld [smem:[#allocation3 + %s898]]
    %s900 = scalar_lea.vmem [#allocation4], %s899
    %v901 = vld [vmem:[%s900] sm:$0x1]
    %s902 = sadd.s32 %s64, 61
    %s903 = sld [smem:[#allocation3 + %s902]]
    %s904 = scalar_lea.vmem [#allocation4], %s903
    %v905 = vld [vmem:[%s904] sm:$0x1]
    %v907 = vrot.slane %v881, 7
    %v910 = vrot.slane %v885, 6
    %v913 = vrot.slane %v889, 5
    %v916 = vrot.slane %v893, 4
    %v919 = vrot.slane %v897, 3
    %v922 = vrot.slane %v901, 2
    %v925 = vrot.slane %v905, 1
    %v927 = vsel %vm121, %v877, %v907
    %v928 = vsel %vm123, %v927, %v910
    %v929 = vsel %vm125, %v928, %v913
    %v930 = vsel %vm127, %v929, %v916
    %v931 = vsel %vm129, %v930, %v919
    %v932 = vsel %vm131, %v931, %v922
    %v933 = vsel %vm133, %v932, %v925
    %935 = vrot.lane.b32.xlu0 %v873, 32
    %v936 = vpop.permute.xlu0 %935
    %v937 = vsel %vm135, %v936, 0
    %939 = vmatprep.subr.mxu0 0.0
    %940 = vmatpush1.msra.mxu0 %v65
    %941 = vmatprep.subr.mxu0 0.0
    %942 = vmatpush1.msra.mxu0 %v66
    %943 = vmatprep.subr.mxu0 0.0
    %944 = vmatpush1.msra.mxu0 %v67
    %945 = vmatprep.subr.mxu0 0.0
    %946 = vmatpush1.msra.mxu0 %v68
    %947 = vmatprep.subr.mxu0 0.0
    %948 = vmatpush1.msra.mxu0 0.0
    %949 = vmatprep.subr.mxu0 0.0
    %950 = vmatpush1.msra.mxu0 0.0
    %951 = vmatprep.subr.mxu0 0.0
    %952 = vmatpush1.msra.mxu0 0.0
    %953 = vmatprep.subr.mxu0 0.0
    %954 = vmatpush1.msra.mxu0 0.0
    %955 = vmatprep.subr.mxu0 0.0
    %956 = vmatpush1.msra.mxu0 0.0
    %957 = vmatprep.subr.mxu0 0.0
    %958 = vmatpush1.msra.mxu0 0.0
    %959 = vmatprep.subr.mxu0 0.0
    %960 = vmatpush1.msra.mxu0 0.0
    %961 = vmatprep.subr.mxu0 0.0
    %962 = vmatpush1.msra.mxu0 0.0
    %963 = vmatprep.subr.mxu0 0.0
    %964 = vmatpush1.msra.mxu0 0.0
    %965 = vmatprep.subr.mxu0 0.0
    %966 = vmatpush1.msra.mxu0 0.0
    %967 = vmatprep.subr.mxu0 0.0
    %968 = vmatpush1.msra.mxu0 0.0
    %969 = vmatprep.subr.mxu0 0.0
    %970 = vmatpush1.msra.mxu0 0.0
    %971 = vmatprep.subr.mxu0 0.0
    %972 = vmatpush1.msra.mxu0 0.0
    %973 = vmatprep.subr.mxu0 0.0
    %974 = vmatpush1.msra.mxu0 0.0
    %975 = vmatprep.subr.mxu0 0.0
    %976 = vmatpush1.msra.mxu0 0.0
    %977 = vmatprep.subr.mxu0 0.0
    %978 = vmatpush1.msra.mxu0 0.0
    %979 = vmatprep.subr.mxu0 0.0
    %980 = vmatpush1.msra.mxu0 0.0
    %981 = vmatprep.subr.mxu0 0.0
    %982 = vmatpush1.msra.mxu0 0.0
    %983 = vmatprep.subr.mxu0 0.0
    %984 = vmatpush1.msra.mxu0 0.0
    %985 = vmatprep.subr.mxu0 0.0
    %986 = vmatpush1.msra.mxu0 0.0
    %987 = vmatprep.subr.mxu0 0.0
    %988 = vmatpush1.msra.mxu0 0.0
    %989 = vmatprep.subr.mxu0 0.0
    %990 = vmatpush1.msra.mxu0 0.0
    %991 = vmatprep.subr.mxu0 0.0
    %992 = vmatpush1.msra.mxu0 0.0
    %993 = vmatprep.subr.mxu0 0.0
    %994 = vmatpush1.msra.mxu0 0.0
    %995 = vmatprep.subr.mxu0 0.0
    %996 = vmatpush1.msra.mxu0 0.0
    %997 = vmatprep.subr.mxu0 0.0
    %998 = vmatpush1.msra.mxu0 0.0
    %999 = vmatprep.subr.mxu0 0.0
    %1000 = vmatpush1.msra.mxu0 0.0
    %1001 = vmatprep.subr.mxu0 0.0
    %1002 = vmatpush1.msra.mxu0 0.0
    %1003 = vmatprep.mubr.f32.mxu0 0.0
    %1004 = vmatmul.mubr.f32.gmra.mrb[0].mxu0 %v937
    %v1005 = vpop.f32.mrb[0].mxu0
    %v1006 = vadd.f32 0.0, %v1005
    %v1007 = vpop.f32.mrb[0].mxu0
    %1008 = vdwg.mxu0
    %v1009 = vadd.f32 %v933, %v1006
    %v1010 = vxor.u32 %v1009, 2147483648
    %v1011 = vmul.f32 %v1010, 1.442695
    %v1012 = vpow.pop %v1011
    %v1013 = vadd.f32 %v1012, 1.0
    %v1014 = vrcp.pop %v1013
    %v1015 = vmul.f32 1.0, %v1014
    %v1016 = vtanh.pop %v1009
    %v1017 = vmul.f32 %v1015, %v867
    %1019 = vrot.lane.b32.xlu0 %v1016, 64
    %v1020 = vpop.permute.xlu0 %1019
    %v1022 = vmul.f32 %v1015, %v1020
    %1024 = vrot.lane.b32.xlu0 %v1022, 32
    %v1025 = vpop.permute.xlu0 %1024
    %v1027 = vadd.f32 %v1017, %v1025
    %v1028 = vtanh.pop %v1027
    %1030 = vrot.lane.b32.xlu0 %v1028, 64
    %v1031 = vpop.permute.xlu0 %1030
    %v1033 = vmul.f32 %v1015, %v1031
    %s1034 = sadd.s32 %s64, 6
    %s1035 = sld [smem:[#allocation3 + %s1034]]
    %s1036 = scalar_lea.vmem [#allocation4], %s1035
    %v1037 = vld [vmem:[%s1036] sm:$0x1]
    %s1038 = sadd.s32 %s64, 14
    %s1039 = sld [smem:[#allocation3 + %s1038]]
    %s1040 = scalar_lea.vmem [#allocation4], %s1039
    %v1041 = vld [vmem:[%s1040] sm:$0x1]
    %s1042 = sadd.s32 %s64, 22
    %s1043 = sld [smem:[#allocation3 + %s1042]]
    %s1044 = scalar_lea.vmem [#allocation4], %s1043
    %v1045 = vld [vmem:[%s1044] sm:$0x1]
    %s1046 = sadd.s32 %s64, 30
    %s1047 = sld [smem:[#allocation3 + %s1046]]
    %s1048 = scalar_lea.vmem [#allocation4], %s1047
    %v1049 = vld [vmem:[%s1048] sm:$0x1]
    %s1050 = sadd.s32 %s64, 38
    %s1051 = sld [smem:[#allocation3 + %s1050]]
    %s1052 = scalar_lea.vmem [#allocation4], %s1051
    %v1053 = vld [vmem:[%s1052] sm:$0x1]
    %s1054 = sadd.s32 %s64, 46
    %s1055 = sld [smem:[#allocation3 + %s1054]]
    %s1056 = scalar_lea.vmem [#allocation4], %s1055
    %v1057 = vld [vmem:[%s1056] sm:$0x1]
    %s1058 = sadd.s32 %s64, 54
    %s1059 = sld [smem:[#allocation3 + %s1058]]
    %s1060 = scalar_lea.vmem [#allocation4], %s1059
    %v1061 = vld [vmem:[%s1060] sm:$0x1]
    %s1062 = sadd.s32 %s64, 62
    %s1063 = sld [smem:[#allocation3 + %s1062]]
    %s1064 = scalar_lea.vmem [#allocation4], %s1063
    %v1065 = vld [vmem:[%s1064] sm:$0x1]
    %v1067 = vrot.slane %v1041, 7
    %v1070 = vrot.slane %v1045, 6
    %v1073 = vrot.slane %v1049, 5
    %v1076 = vrot.slane %v1053, 4
    %v1079 = vrot.slane %v1057, 3
    %v1082 = vrot.slane %v1061, 2
    %v1085 = vrot.slane %v1065, 1
    %v1087 = vsel %vm121, %v1037, %v1067
    %v1088 = vsel %vm123, %v1087, %v1070
    %v1089 = vsel %vm125, %v1088, %v1073
    %v1090 = vsel %vm127, %v1089, %v1076
    %v1091 = vsel %vm129, %v1090, %v1079
    %v1092 = vsel %vm131, %v1091, %v1082
    %v1093 = vsel %vm133, %v1092, %v1085
    %1095 = vrot.lane.b32.xlu0 %v1033, 32
    %v1096 = vpop.permute.xlu0 %1095
    %v1097 = vsel %vm135, %v1096, 0
    %1099 = vmatprep.subr.mxu0 0.0
    %1100 = vmatpush1.msra.mxu0 %v65
    %1101 = vmatprep.subr.mxu0 0.0
    %1102 = vmatpush1.msra.mxu0 %v66
    %1103 = vmatprep.subr.mxu0 0.0
    %1104 = vmatpush1.msra.mxu0 %v67
    %1105 = vmatprep.subr.mxu0 0.0
    %1106 = vmatpush1.msra.mxu0 %v68
    %1107 = vmatprep.subr.mxu0 0.0
    %1108 = vmatpush1.msra.mxu0 0.0
    %1109 = vmatprep.subr.mxu0 0.0
    %1110 = vmatpush1.msra.mxu0 0.0
    %1111 = vmatprep.subr.mxu0 0.0
    %1112 = vmatpush1.msra.mxu0 0.0
    %1113 = vmatprep.subr.mxu0 0.0
    %1114 = vmatpush1.msra.mxu0 0.0
    %1115 = vmatprep.subr.mxu0 0.0
    %1116 = vmatpush1.msra.mxu0 0.0
    %1117 = vmatprep.subr.mxu0 0.0
    %1118 = vmatpush1.msra.mxu0 0.0
    %1119 = vmatprep.subr.mxu0 0.0
    %1120 = vmatpush1.msra.mxu0 0.0
    %1121 = vmatprep.subr.mxu0 0.0
    %1122 = vmatpush1.msra.mxu0 0.0
    %1123 = vmatprep.subr.mxu0 0.0
    %1124 = vmatpush1.msra.mxu0 0.0
    %1125 = vmatprep.subr.mxu0 0.0
    %1126 = vmatpush1.msra.mxu0 0.0
    %1127 = vmatprep.subr.mxu0 0.0
    %1128 = vmatpush1.msra.mxu0 0.0
    %1129 = vmatprep.subr.mxu0 0.0
    %1130 = vmatpush1.msra.mxu0 0.0
    %1131 = vmatprep.subr.mxu0 0.0
    %1132 = vmatpush1.msra.mxu0 0.0
    %1133 = vmatprep.subr.mxu0 0.0
    %1134 = vmatpush1.msra.mxu0 0.0
    %1135 = vmatprep.subr.mxu0 0.0
    %1136 = vmatpush1.msra.mxu0 0.0
    %1137 = vmatprep.subr.mxu0 0.0
    %1138 = vmatpush1.msra.mxu0 0.0
    %1139 = vmatprep.subr.mxu0 0.0
    %1140 = vmatpush1.msra.mxu0 0.0
    %1141 = vmatprep.subr.mxu0 0.0
    %1142 = vmatpush1.msra.mxu0 0.0
    %1143 = vmatprep.subr.mxu0 0.0
    %1144 = vmatpush1.msra.mxu0 0.0
    %1145 = vmatprep.subr.mxu0 0.0
    %1146 = vmatpush1.msra.mxu0 0.0
    %1147 = vmatprep.subr.mxu0 0.0
    %1148 = vmatpush1.msra.mxu0 0.0
    %1149 = vmatprep.subr.mxu0 0.0
    %1150 = vmatpush1.msra.mxu0 0.0
    %1151 = vmatprep.subr.mxu0 0.0
    %1152 = vmatpush1.msra.mxu0 0.0
    %1153 = vmatprep.subr.mxu0 0.0
    %1154 = vmatpush1.msra.mxu0 0.0
    %1155 = vmatprep.subr.mxu0 0.0
    %1156 = vmatpush1.msra.mxu0 0.0
    %1157 = vmatprep.subr.mxu0 0.0
    %1158 = vmatpush1.msra.mxu0 0.0
    %1159 = vmatprep.subr.mxu0 0.0
    %1160 = vmatpush1.msra.mxu0 0.0
    %1161 = vmatprep.subr.mxu0 0.0
    %1162 = vmatpush1.msra.mxu0 0.0
    %1163 = vmatprep.mubr.f32.mxu0 0.0
    %1164 = vmatmul.mubr.f32.gmra.mrb[0].mxu0 %v1097
    %v1165 = vpop.f32.mrb[0].mxu0
    %v1166 = vadd.f32 0.0, %v1165
    %v1167 = vpop.f32.mrb[0].mxu0
    %1168 = vdwg.mxu0
    %v1169 = vadd.f32 %v1093, %v1166
    %v1170 = vxor.u32 %v1169, 2147483648
    %v1171 = vmul.f32 %v1170, 1.442695
    %v1172 = vpow.pop %v1171
    %v1173 = vadd.f32 %v1172, 1.0
    %v1174 = vrcp.pop %v1173
    %v1175 = vmul.f32 1.0, %v1174
    %v1176 = vtanh.pop %v1169
    %v1177 = vmul.f32 %v1175, %v1027
    %1179 = vrot.lane.b32.xlu0 %v1176, 64
    %v1180 = vpop.permute.xlu0 %1179
    %v1182 = vmul.f32 %v1175, %v1180
    %1184 = vrot.lane.b32.xlu0 %v1182, 32
    %v1185 = vpop.permute.xlu0 %1184
    %v1187 = vadd.f32 %v1177, %v1185
    %v1188 = vtanh.pop %v1187
    %1190 = vrot.lane.b32.xlu0 %v1188, 64
    %v1191 = vpop.permute.xlu0 %1190
    %v1193 = vmul.f32 %v1175, %v1191
    %s1194 = sadd.s32 %s64, 7
    %s1195 = sld [smem:[#allocation3 + %s1194]]
    %s1196 = scalar_lea.vmem [#allocation4], %s1195
    %v1197 = vld [vmem:[%s1196] sm:$0x1]
    %s1198 = sadd.s32 %s64, 15
    %s1199 = sld [smem:[#allocation3 + %s1198]]
    %s1200 = scalar_lea.vmem [#allocation4], %s1199
    %v1201 = vld [vmem:[%s1200] sm:$0x1]
    %s1202 = sadd.s32 %s64, 23
    %s1203 = sld [smem:[#allocation3 + %s1202]]
    %s1204 = scalar_lea.vmem [#allocation4], %s1203
    %v1205 = vld [vmem:[%s1204] sm:$0x1]
    %s1206 = sadd.s32 %s64, 31
    %s1207 = sld [smem:[#allocation3 + %s1206]]
    %s1208 = scalar_lea.vmem [#allocation4], %s1207
    %v1209 = vld [vmem:[%s1208] sm:$0x1]
    %s1210 = sadd.s32 %s64, 39
    %s1211 = sld [smem:[#allocation3 + %s1210]]
    %s1212 = scalar_lea.vmem [#allocation4], %s1211
    %v1213 = vld [vmem:[%s1212] sm:$0x1]
    %s1214 = sadd.s32 %s64, 47
    %s1215 = sld [smem:[#allocation3 + %s1214]]
    %s1216 = scalar_lea.vmem [#allocation4], %s1215
    %v1217 = vld [vmem:[%s1216] sm:$0x1]
    %s1218 = sadd.s32 %s64, 55
    %s1219 = sld [smem:[#allocation3 + %s1218]]
    %s1220 = scalar_lea.vmem [#allocation4], %s1219
    %v1221 = vld [vmem:[%s1220] sm:$0x1]
    %s1222 = sadd.s32 %s64, 63
    %s1223 = sld [smem:[#allocation3 + %s1222]]
    %s1224 = scalar_lea.vmem [#allocation4], %s1223
    %v1225 = vld [vmem:[%s1224] sm:$0x1]
    %v1227 = vrot.slane %v1201, 7
    %v1230 = vrot.slane %v1205, 6
    %v1233 = vrot.slane %v1209, 5
    %v1236 = vrot.slane %v1213, 4
    %v1239 = vrot.slane %v1217, 3
    %v1242 = vrot.slane %v1221, 2
    %v1245 = vrot.slane %v1225, 1
    %v1247 = vsel %vm121, %v1197, %v1227
    %v1248 = vsel %vm123, %v1247, %v1230
    %v1249 = vsel %vm125, %v1248, %v1233
    %v1250 = vsel %vm127, %v1249, %v1236
    %v1251 = vsel %vm129, %v1250, %v1239
    %v1252 = vsel %vm131, %v1251, %v1242
    %v1253 = vsel %vm133, %v1252, %v1245
    %1255 = vrot.lane.b32.xlu0 %v1193, 32
    %v1256 = vpop.permute.xlu0 %1255
    %v1257 = vsel %vm135, %v1256, 0
    %1259 = vmatprep.subr.mxu0 0.0
    %1260 = vmatpush1.msra.mxu0 %v65
    %1261 = vmatprep.subr.mxu0 0.0
    %1262 = vmatpush1.msra.mxu0 %v66
    %1263 = vmatprep.subr.mxu0 0.0
    %1264 = vmatpush1.msra.mxu0 %v67
    %1265 = vmatprep.subr.mxu0 0.0
    %1266 = vmatpush1.msra.mxu0 %v68
    %1267 = vmatprep.subr.mxu0 0.0
    %1268 = vmatpush1.msra.mxu0 0.0
    %1269 = vmatprep.subr.mxu0 0.0
    %1270 = vmatpush1.msra.mxu0 0.0
    %1271 = vmatprep.subr.mxu0 0.0
    %1272 = vmatpush1.msra.mxu0 0.0
    %1273 = vmatprep.subr.mxu0 0.0
    %1274 = vmatpush1.msra.mxu0 0.0
    %1275 = vmatprep.subr.mxu0 0.0
    %1276 = vmatpush1.msra.mxu0 0.0
    %1277 = vmatprep.subr.mxu0 0.0
    %1278 = vmatpush1.msra.mxu0 0.0
    %1279 = vmatprep.subr.mxu0 0.0
    %1280 = vmatpush1.msra.mxu0 0.0
    %1281 = vmatprep.subr.mxu0 0.0
    %1282 = vmatpush1.msra.mxu0 0.0
    %1283 = vmatprep.subr.mxu0 0.0
    %1284 = vmatpush1.msra.mxu0 0.0
    %1285 = vmatprep.subr.mxu0 0.0
    %1286 = vmatpush1.msra.mxu0 0.0
    %1287 = vmatprep.subr.mxu0 0.0
    %1288 = vmatpush1.msra.mxu0 0.0
    %1289 = vmatprep.subr.mxu0 0.0
    %1290 = vmatpush1.msra.mxu0 0.0
    %1291 = vmatprep.subr.mxu0 0.0
    %1292 = vmatpush1.msra.mxu0 0.0
    %1293 = vmatprep.subr.mxu0 0.0
    %1294 = vmatpush1.msra.mxu0 0.0
    %1295 = vmatprep.subr.mxu0 0.0
    %1296 = vmatpush1.msra.mxu0 0.0
    %1297 = vmatprep.subr.mxu0 0.0
    %1298 = vmatpush1.msra.mxu0 0.0
    %1299 = vmatprep.subr.mxu0 0.0
    %1300 = vmatpush1.msra.mxu0 0.0
    %1301 = vmatprep.subr.mxu0 0.0
    %1302 = vmatpush1.msra.mxu0 0.0
    %1303 = vmatprep.subr.mxu0 0.0
    %1304 = vmatpush1.msra.mxu0 0.0
    %1305 = vmatprep.subr.mxu0 0.0
    %1306 = vmatpush1.msra.mxu0 0.0
    %1307 = vmatprep.subr.mxu0 0.0
    %1308 = vmatpush1.msra.mxu0 0.0
    %1309 = vmatprep.subr.mxu0 0.0
    %1310 = vmatpush1.msra.mxu0 0.0
    %1311 = vmatprep.subr.mxu0 0.0
    %1312 = vmatpush1.msra.mxu0 0.0
    %1313 = vmatprep.subr.mxu0 0.0
    %1314 = vmatpush1.msra.mxu0 0.0
    %1315 = vmatprep.subr.mxu0 0.0
    %1316 = vmatpush1.msra.mxu0 0.0
    %1317 = vmatprep.subr.mxu0 0.0
    %1318 = vmatpush1.msra.mxu0 0.0
    %1319 = vmatprep.subr.mxu0 0.0
    %1320 = vmatpush1.msra.mxu0 0.0
    %1321 = vmatprep.subr.mxu0 0.0
    %1322 = vmatpush1.msra.mxu0 0.0
    %1323 = vmatprep.mubr.f32.mxu0 0.0
    %1324 = vmatmul.mubr.f32.gmra.mrb[0].mxu0 %v1257
    %v1325 = vpop.f32.mrb[0].mxu0
    %v1326 = vadd.f32 0.0, %v1325
    %v1327 = vpop.f32.mrb[0].mxu0
    %1328 = vdwg.mxu0
    %v1329 = vadd.f32 %v1253, %v1326
    %v1330 = vxor.u32 %v1329, 2147483648
    %v1331 = vmul.f32 %v1330, 1.442695
    %v1332 = vpow.pop %v1331
    %v1333 = vadd.f32 %v1332, 1.0
    %v1334 = vrcp.pop %v1333
    %v1335 = vmul.f32 1.0, %v1334
    %v1336 = vtanh.pop %v1329
    %v1337 = vmul.f32 %v1335, %v1187
    %1339 = vrot.lane.b32.xlu0 %v1336, 64
    %v1340 = vpop.permute.xlu0 %1339
    %v1342 = vmul.f32 %v1335, %v1340
    %1344 = vrot.lane.b32.xlu0 %v1342, 32
    %v1345 = vpop.permute.xlu0 %1344
    %v1347 = vadd.f32 %v1337, %v1345
    %v1348 = vtanh.pop %v1347
    %1350 = vrot.lane.b32.xlu0 %v1348, 64
    %v1351 = vpop.permute.xlu0 %1350
    %v1353 = vmul.f32 %v1335, %v1351
    %v1354 = vld [vmem:[#allocation9] sm:$0xff]
    %v1355 = vld [vmem:[#allocation9 + $0x8] sm:$0xff]
    %v1356 = vld [vmem:[#allocation9 + $0x10] sm:$0xff]
    %v1357 = vld [vmem:[#allocation9 + $0x18] sm:$0xff]
    %v1358 = vld [vmem:[%s4] sm:$0x1]
    %v1360 = vlaneseq
    %v1361 = vshrl.u32 %v1360, 7
    %v1362 = vsub.s32 0, %v1361
    %v1363 = vrot.slane %v1358, %v1362
    %1366 = vrot.lane.b32.xlu0 %v1353, 32
    %v1367 = vpop.permute.xlu0 %1366
    %v1368 = vsel %vm135, %v1367, 0
    %1370 = vmatprep.subr.mxu0 0.0
    %1371 = vmatpush1.msra.mxu0 %v1354
    %1372 = vmatprep.subr.mxu0 0.0
    %1373 = vmatpush1.msra.mxu0 %v1355
    %1374 = vmatprep.subr.mxu0 0.0
    %1375 = vmatpush1.msra.mxu0 %v1356
    %1376 = vmatprep.subr.mxu0 0.0
    %1377 = vmatpush1.msra.mxu0 %v1357
    %1378 = vmatprep.subr.mxu0 0.0
    %1379 = vmatpush1.msra.mxu0 0.0
    %1380 = vmatprep.subr.mxu0 0.0
    %1381 = vmatpush1.msra.mxu0 0.0
    %1382 = vmatprep.subr.mxu0 0.0
    %1383 = vmatpush1.msra.mxu0 0.0
    %1384 = vmatprep.subr.mxu0 0.0
    %1385 = vmatpush1.msra.mxu0 0.0
    %1386 = vmatprep.subr.mxu0 0.0
    %1387 = vmatpush1.msra.mxu0 0.0
    %1388 = vmatprep.subr.mxu0 0.0
    %1389 = vmatpush1.msra.mxu0 0.0
    %1390 = vmatprep.subr.mxu0 0.0
    %1391 = vmatpush1.msra.mxu0 0.0
    %1392 = vmatprep.subr.mxu0 0.0
    %1393 = vmatpush1.msra.mxu0 0.0
    %1394 = vmatprep.subr.mxu0 0.0
    %1395 = vmatpush1.msra.mxu0 0.0
    %1396 = vmatprep.subr.mxu0 0.0
    %1397 = vmatpush1.msra.mxu0 0.0
    %1398 = vmatprep.subr.mxu0 0.0
    %1399 = vmatpush1.msra.mxu0 0.0
    %1400 = vmatprep.subr.mxu0 0.0
    %1401 = vmatpush1.msra.mxu0 0.0
    %1402 = vmatprep.subr.mxu0 0.0
    %1403 = vmatpush1.msra.mxu0 0.0
    %1404 = vmatprep.subr.mxu0 0.0
    %1405 = vmatpush1.msra.mxu0 0.0
    %1406 = vmatprep.subr.mxu0 0.0
    %1407 = vmatpush1.msra.mxu0 0.0
    %1408 = vmatprep.subr.mxu0 0.0
    %1409 = vmatpush1.msra.mxu0 0.0
    %1410 = vmatprep.subr.mxu0 0.0
    %1411 = vmatpush1.msra.mxu0 0.0
    %1412 = vmatprep.subr.mxu0 0.0
    %1413 = vmatpush1.msra.mxu0 0.0
    %1414 = vmatprep.subr.mxu0 0.0
    %1415 = vmatpush1.msra.mxu0 0.0
    %1416 = vmatprep.subr.mxu0 0.0
    %1417 = vmatpush1.msra.mxu0 0.0
    %1418 = vmatprep.subr.mxu0 0.0
    %1419 = vmatpush1.msra.mxu0 0.0
    %1420 = vmatprep.subr.mxu0 0.0
    %1421 = vmatpush1.msra.mxu0 0.0
    %1422 = vmatprep.subr.mxu0 0.0
    %1423 = vmatpush1.msra.mxu0 0.0
    %1424 = vmatprep.subr.mxu0 0.0
    %1425 = vmatpush1.msra.mxu0 0.0
    %1426 = vmatprep.subr.mxu0 0.0
    %1427 = vmatpush1.msra.mxu0 0.0
    %1428 = vmatprep.subr.mxu0 0.0
    %1429 = vmatpush1.msra.mxu0 0.0
    %1430 = vmatprep.subr.mxu0 0.0
    %1431 = vmatpush1.msra.mxu0 0.0
    %1432 = vmatprep.subr.mxu0 0.0
    %1433 = vmatpush1.msra.mxu0 0.0
    %1434 = vmatprep.mubr.f32.mxu0 0.0
    %1435 = vmatmul.mubr.f32.gmra.mrb[0].mxu0 %v297
    %v1436 = vpop.f32.mrb[0].mxu0
    %v1437 = vadd.f32 %v1363, %v1436
    %v1438 = vpop.f32.mrb[0].mxu0
    %1439 = vmatprep.mubr.f32.mxu0 0.0
    %1440 = vmatmul.mubr.f32.gmra.mrb[0].mxu0 %v457
    %v1441 = vpop.f32.mrb[0].mxu0
    %v1442 = vadd.f32 %v1363, %v1441
    %v1443 = vpop.f32.mrb[0].mxu0
    %1444 = vmatprep.mubr.f32.mxu0 0.0
    %1445 = vmatmul.mubr.f32.gmra.mrb[0].mxu0 %v617
    %v1446 = vpop.f32.mrb[0].mxu0
    %v1447 = vadd.f32 %v1363, %v1446
    %v1448 = vpop.f32.mrb[0].mxu0
    %1449 = vmatprep.mubr.f32.mxu0 0.0
    %1450 = vmatmul.mubr.f32.gmra.mrb[0].mxu0 %v777
    %v1451 = vpop.f32.mrb[0].mxu0
    %v1452 = vadd.f32 %v1363, %v1451
    %v1453 = vpop.f32.mrb[0].mxu0
    %1454 = vmatprep.mubr.f32.mxu0 0.0
    %1455 = vmatmul.mubr.f32.gmra.mrb[0].mxu0 %v937
    %v1456 = vpop.f32.mrb[0].mxu0
    %v1457 = vadd.f32 %v1363, %v1456
    %v1458 = vpop.f32.mrb[0].mxu0
    %1459 = vmatprep.mubr.f32.mxu0 0.0
    %1460 = vmatmul.mubr.f32.gmra.mrb[0].mxu0 %v1097
    %v1461 = vpop.f32.mrb[0].mxu0
    %v1462 = vadd.f32 %v1363, %v1461
    %v1463 = vpop.f32.mrb[0].mxu0
    %1464 = vmatprep.mubr.f32.mxu0 0.0
    %1465 = vmatmul.mubr.f32.gmra.mrb[0].mxu0 %v1257
    %v1466 = vpop.f32.mrb[0].mxu0
    %v1467 = vadd.f32 %v1363, %v1466
    %v1468 = vpop.f32.mrb[0].mxu0
    %1469 = vmatprep.mubr.f32.mxu0 0.0
    %1470 = vmatmul.mubr.f32.gmra.mrb[0].mxu0 %v1368
    %v1471 = vpop.f32.mrb[0].mxu0
    %v1472 = vadd.f32 %v1363, %v1471
    %v1473 = vpop.f32.mrb[0].mxu0
    %1474 = vdwg.mxu0
    %1475 = vmax.xlane.f32.xlu0 %v1437
    %v1476 = vpop.xlane.xlu0 %1475
    %1477 = vmax.xlane.f32.xlu0 %v1442
    %v1478 = vpop.xlane.xlu0 %1477
    %1479 = vmax.xlane.f32.xlu0 %v1447
    %v1480 = vpop.xlane.xlu0 %1479
    %1481 = vmax.xlane.f32.xlu0 %v1452
    %v1482 = vpop.xlane.xlu0 %1481
    %1483 = vmax.xlane.f32.xlu0 %v1457
    %v1484 = vpop.xlane.xlu0 %1483
    %1485 = vmax.xlane.f32.xlu0 %v1462
    %v1486 = vpop.xlane.xlu0 %1485
    %1487 = vmax.xlane.f32.xlu0 %v1467
    %v1488 = vpop.xlane.xlu0 %1487
    %1489 = vmax.xlane.f32.xlu0 %v1472
    %v1490 = vpop.xlane.xlu0 %1489
    %v1491 = vsub.f32 %v1437, %v1476
    %v1492 = vsub.f32 %v1442, %v1478
    %v1493 = vsub.f32 %v1447, %v1480
    %v1494 = vsub.f32 %v1452, %v1482
    %v1495 = vsub.f32 %v1457, %v1484
    %v1496 = vsub.f32 %v1462, %v1486
    %v1497 = vsub.f32 %v1467, %v1488
    %v1498 = vsub.f32 %v1472, %v1490
    %v1499 = vmul.f32 %v1491, 1.442695
    %v1500 = vpow.pop %v1499
    %v1501 = vmul.f32 %v1492, 1.442695
    %v1502 = vpow.pop %v1501
    %v1503 = vmul.f32 %v1493, 1.442695
    %v1504 = vpow.pop %v1503
    %v1505 = vmul.f32 %v1494, 1.442695
    %v1506 = vpow.pop %v1505
    %v1507 = vmul.f32 %v1495, 1.442695
    %v1508 = vpow.pop %v1507
    %v1509 = vmul.f32 %v1496, 1.442695
    %v1510 = vpow.pop %v1509
    %v1511 = vmul.f32 %v1497, 1.442695
    %v1512 = vpow.pop %v1511
    %v1513 = vmul.f32 %v1498, 1.442695
    %v1514 = vpow.pop %v1513
    %1515 = vadd.xlane.f32.xlu0 %v1500
    %v1516 = vpop.xlane.xlu0 %1515
    %1517 = vadd.xlane.f32.xlu0 %v1502
    %v1518 = vpop.xlane.xlu0 %1517
    %1519 = vadd.xlane.f32.xlu0 %v1504
    %v1520 = vpop.xlane.xlu0 %1519
    %1521 = vadd.xlane.f32.xlu0 %v1506
    %v1522 = vpop.xlane.xlu0 %1521
    %1523 = vadd.xlane.f32.xlu0 %v1508
    %v1524 = vpop.xlane.xlu0 %1523
    %1525 = vadd.xlane.f32.xlu0 %v1510
    %v1526 = vpop.xlane.xlu0 %1525
    %1527 = vadd.xlane.f32.xlu0 %v1512
    %v1528 = vpop.xlane.xlu0 %1527
    %1529 = vadd.xlane.f32.xlu0 %v1514
    %v1530 = vpop.xlane.xlu0 %1529
    %v1531 = vlog2.pop %v1516
    %v1532 = vmul.f32 %v1531, 0.6931472
    %v1533 = vlog2.pop %v1518
    %v1534 = vmul.f32 %v1533, 0.6931472
    %v1535 = vlog2.pop %v1520
    %v1536 = vmul.f32 %v1535, 0.6931472
    %v1537 = vlog2.pop %v1522
    %v1538 = vmul.f32 %v1537, 0.6931472
    %v1539 = vlog2.pop %v1524
    %v1540 = vmul.f32 %v1539, 0.6931472
    %v1541 = vlog2.pop %v1526
    %v1542 = vmul.f32 %v1541, 0.6931472
    %v1543 = vlog2.pop %v1528
    %v1544 = vmul.f32 %v1543, 0.6931472
    %v1545 = vlog2.pop %v1530
    %v1546 = vmul.f32 %v1545, 0.6931472
    %v1547 = vadd.f32 %v1476, %v1532
    %v1548 = vadd.f32 %v1478, %v1534
    %v1549 = vadd.f32 %v1480, %v1536
    %v1550 = vadd.f32 %v1482, %v1538
    %v1551 = vadd.f32 %v1484, %v1540
    %v1552 = vadd.f32 %v1486, %v1542
    %v1553 = vadd.f32 %v1488, %v1544
    %v1554 = vadd.f32 %v1490, %v1546
    %v1555 = vsub.f32 %v1437, %v1547
    %v1556 = vsub.f32 %v1442, %v1548
    %v1557 = vsub.f32 %v1447, %v1549
    %v1558 = vsub.f32 %v1452, %v1550
    %v1559 = vsub.f32 %v1457, %v1551
    %v1560 = vsub.f32 %v1462, %v1552
    %v1561 = vsub.f32 %v1467, %v1553
    %v1562 = vsub.f32 %v1472, %v1554
    %1563 = vst [vmem:[#allocation10] sm:$0xff] %v1555
    %1564 = vst [vmem:[#allocation10 + $0x8] sm:$0xff] %v1556
    %1565 = vst [vmem:[#allocation10 + $0x10] sm:$0xff] %v1557
    %1566 = vst [vmem:[#allocation10 + $0x18] sm:$0xff] %v1558
    %1567 = vst [vmem:[#allocation10 + $0x20] sm:$0xff] %v1559
    %1568 = vst [vmem:[#allocation10 + $0x28] sm:$0xff] %v1560
    %1569 = vst [vmem:[#allocation10 + $0x30] sm:$0xff] %v1561
    %1570 = vst [vmem:[#allocation10 + $0x38] sm:$0xff] %v1562
    // Predicated region
    $region30: #{tpu_custom_call.1} parent=1 // pred_check
      _
    $region31: #{tpu_custom_call.1} parent=1 // pred_check_branch
      %1572 = sbr.rel (0) target = $region33
    $region32: #{tpu_custom_call.1} parent=1 // pred_region
      %s1574 = ssub.s32 1024, 1024
      %1575 = vsyncadd [#allocation6], %s1574
      %s1576 = sshll.u32 [#allocation10], 4
      %s1577 = int_to_ptr.vmem [resolvable:$true] %s1576
      %1582 = dma.vmem_to_hbm [thread:$0]  %s1577, 1024, %s5, [#allocation6], 128, 128, 8
    $region33: #{tpu_custom_call.1} parent=1 // pred_fallthru
      _
    // Predicated region
    $region34: #{tpu_custom_call.1} parent=1 // pred_check
      _
    $region35: #{tpu_custom_call.1} parent=1 // pred_check_branch
      %1584 = sbr.rel (0) target = $region37
    $region36: #{tpu_custom_call.1} parent=1 // pred_region
      %1585 = dma.done [#allocation6], 1024
    $region37: #{tpu_custom_call.1} parent=1 // pred_fallthru
      _
    %1586 = vsyncpa [#allocation5], 1
    %1587 = vsyncpa [#allocation8], 1
    %1588 = vsyncpa [#allocation6], 1

</llo_original>
